<compile_context>
chip_gen: v7x
topology: tpu7x:2x2x1
jax: 0.10.0
libtpu: 0.0.40
codegen_flags: <defaults>
</compile_context>

<pallas_src>
import functools

import jax
import jax.numpy as jnp
from jax.experimental import pallas as pl
from jax.experimental.pallas import tpu as pltpu


# dot_general dimension numbers for  A (M, K) @ B (N, K)^T  -> (M, N)
_TRANS_B_DIMS = (((1,), (1,)), ((), ()))


def _conv_stats_kernel(x_ref, w_ref, conv_ref, stats_ref, *, KH, KW, OH, OW, stride):
    """Direct conv for one image (channel-major output) + fused BN partial stats.

    x_ref:     (1, Hp, Wp, C_in)     bf16 spatially zero-padded NHWC input
    w_ref:     (KH, KW, C_out, C_in) bf16 weights (per-tap (C_out, C_in) slabs)
    conv_ref:  (1, C_out, OH*OW)     bf16 channel-major conv output (lane-dense)
    stats_ref: (1, C_out, 2)         f32 per-image [sum, sum-of-squares] per channel
    """
    c_in = x_ref.shape[-1]
    c_out = conv_ref.shape[1]
    M = OH * OW

    # Local f32 accumulator: tap matmuls are summed here, the output block is
    # written exactly once (no RMW through conv_ref / the store slot).
    acc = jnp.zeros((c_out, M), jnp.float32)
    for kh in range(KH):
        for kw in range(KW):
            if stride == 1:
                ds_h, ds_w = pl.ds(kh, OH), pl.ds(kw, OW)
            else:
                ds_h = pl.ds(kh, OH, stride=stride)
                ds_w = pl.ds(kw, OW, stride=stride)
            win = x_ref[0, ds_h, ds_w, :]                  # (OH, OW, C_in) bf16
            # Collapsing (OH, OW) keeps C_in in lanes; with OW % 8 == 0 the sublane
            # grouping is unchanged, so this is a free view (no relayout copy).
            win2 = win.reshape(M, c_in)
            # W_tap (C_out, C_in) @ win2 (M, C_in)^T -> (C_out, M): channel-major
            # result with the spatial dim in lanes.
            acc = acc + jax.lax.dot_general(
                w_ref[kh, kw], win2, _TRANS_B_DIMS,
                preferred_element_type=jnp.float32)

    conv_ref[0] = acc.astype(conv_ref.dtype)
    # Fused BatchNorm partial statistics straight from the f32 accumulator.
    # NOTE: E[x^2]-E[x]^2 can cancel for very large activations; fine at these
    # magnitudes, else switch to a shifted / two-pass reduction.
    stats_ref[0, :, 0:1] = jnp.sum(acc, axis=1, keepdims=True)
    stats_ref[0, :, 1:2] = jnp.sum(acc * acc, axis=1, keepdims=True)


def _bn_act_kernel(y_ref, scale_ref, bias_ref, o_ref):
    """Folded BN affine + LeakyReLU(0.1) on lane-dense (rows, spatial) blocks."""
    z = y_ref[...].astype(jnp.float32) * scale_ref[...] + bias_ref[...]
    o_ref[...] = jnp.where(z >= 0.0, z, 0.1 * z).astype(o_ref.dtype)


def _largest_tile(n, unit, cap):
    """Largest divisor of n that is a multiple of `unit` and <= cap (fallback: n)."""
    best = None
    t = unit
    while t <= min(n, cap):
        if n % t == 0:
            best = t
        t += unit
    return best if best is not None else n


def conv_block_forward(x_nchw, weight, gamma, beta, *, stride, padding, eps=1e-5):
    N, C_in, H, W = x_nchw.shape
    C_out, _, KH, KW = weight.shape
    OH = (H + 2 * padding - KH) // stride + 1
    OW = (W + 2 * padding - KW) // stride + 1
    Hp, Wp = H + 2 * padding, W + 2 * padding
    M = OH * OW

    # --- XLA glue on the (small) input only: NHWC transpose, zero-pad, bf16 cast ---
    x = jnp.transpose(x_nchw, (0, 2, 3, 1))
    xp = jnp.pad(x, ((0, 0), (padding, padding), (padding, padding), (0, 0)))
    xp = xp.astype(jnp.bfloat16)
    # PyTorch (C_out, C_in, KH, KW) -> (KH, KW, C_out, C_in), bf16 per-tap slabs.
    w = jnp.transpose(weight, (2, 3, 0, 1)).astype(jnp.bfloat16)

    # --- kernel 1: direct conv (no im2col) + fused BN partial statistics -----------
    # For production-size images add an OH-band grid axis here (halo blocks) so the
    # input band stays under v7x's 64 MiB VMEM; whole images are only ~100 KB here.
    conv, stats = pl.pallas_call(
        functools.partial(_conv_stats_kernel, KH=KH, KW=KW, OH=OH, OW=OW,
                          stride=stride),
        out_shape=(jax.ShapeDtypeStruct((N, C_out, M), jnp.bfloat16),
                   jax.ShapeDtypeStruct((N, C_out, 2), jnp.float32)),
        grid_spec=pltpu.PrefetchScalarGridSpec(
            num_scalar_prefetch=0,
            grid=(N,),
            in_specs=[pl.BlockSpec((1, Hp, Wp, C_in), lambda n: (n, 0, 0, 0)),
                      pl.BlockSpec((KH, KW, C_out, C_in), lambda n: (0, 0, 0, 0))],
            out_specs=(pl.BlockSpec((1, C_out, M), lambda n: (n, 0, 0)),
                       pl.BlockSpec((1, C_out, 2), lambda n: (n, 0, 0))),
        ),
        compiler_params=pltpu.CompilerParams(
            dimension_semantics=("parallel",),
            vmem_limit_bytes=32 * 1024 * 1024,
        ),
    )(xp, w)

    # --- fold the tiny (N, C_out, 2) stats into per-channel scale / bias (f32) -----
    m_total = jnp.float32(N * M)
    ch_sum = jnp.sum(stats[:, :, 0], axis=0)                 # (C_out,)
    ch_sumsq = jnp.sum(stats[:, :, 1], axis=0)
    mean = ch_sum / m_total
    var = jnp.maximum(ch_sumsq / m_total - mean * mean, 0.0)  # biased (train mode)
    scale = gamma.astype(jnp.float32) * jax.lax.rsqrt(var + eps)
    bias = beta.astype(jnp.float32) - mean * scale

    # --- kernel 2: BN-apply + LeakyReLU on the flattened channel-major view --------
    rows = N * C_out
    conv2 = conv.reshape(rows, M)                             # free row-major view
    scale_rows = jnp.tile(scale, N).reshape(rows, 1)          # per-row (= channel)
    bias_rows = jnp.tile(bias, N).reshape(rows, 1)

    RT = _largest_tile(rows, 8, 1024)       # sublane rows per block
    TS = _largest_tile(M, 128, 4096)        # lane-dense spatial tile per block
    out_flat = pl.pallas_call(
        _bn_act_kernel,
        out_shape=jax.ShapeDtypeStruct((rows, M), jnp.float32),
        grid_spec=pltpu.PrefetchScalarGridSpec(
            num_scalar_prefetch=0,
            grid=(rows // RT, M // TS),
            in_specs=[pl.BlockSpec((RT, TS), lambda r, s: (r, s)),
                      pl.BlockSpec((RT, 1), lambda r, s: (r, 0)),
                      pl.BlockSpec((RT, 1), lambda r, s: (r, 0))],
            out_specs=pl.BlockSpec((RT, TS), lambda r, s: (r, s)),
        ),
        compiler_params=pltpu.CompilerParams(
            dimension_semantics=("parallel", "parallel"),
            vmem_limit_bytes=32 * 1024 * 1024,
        ),
    )(conv2, scale_rows, bias_rows)

    # Channel-major rows reshape straight into NCHW: no slice / transpose pass.
    return out_flat.reshape(N, C_out, OH, OW)


def _reference(x_nchw, weight, gamma, beta, *, stride, padding, eps=1e-5):
    y = jax.lax.conv_general_dilated(
        x_nchw.astype(jnp.float32), weight.astype(jnp.float32),
        window_strides=(stride, stride),
        padding=[(padding, padding), (padding, padding)],
        dimension_numbers=("NCHW", "OIHW", "NCHW"))
    mean = jnp.mean(y, axis=(0, 2, 3), keepdims=True)
    var = jnp.mean((y - mean) ** 2, axis=(0, 2, 3), keepdims=True)
    z = (y - mean) / jnp.sqrt(var + eps) * gamma.reshape(1, -1, 1, 1) \
        + beta.reshape(1, -1, 1, 1)
    return jnp.where(z >= 0, z, 0.1 * z)


if __name__ == "__main__":
    # ConvBlock(4, 8, kernel_size=3, stride=1, padding=1) at small shapes.
    N, C_in, H, W = 2, 4, 16, 16
    C_out, KH, KW = 8, 3, 3
    stride, padding = 1, 1

    key = jax.random.PRNGKey(0)
    kx, kwk = jax.random.split(key)
    x = jax.random.normal(kx, (N, C_in, H, W), dtype=jnp.float32)
    weight = 0.1 * jax.random.normal(kwk, (C_out, C_in, KH, KW), dtype=jnp.float32)
    gamma = jnp.ones((C_out,), jnp.float32)   # PyTorch BatchNorm2d default init
    beta = jnp.zeros((C_out,), jnp.float32)

    fwd = jax.jit(functools.partial(conv_block_forward, stride=stride,
                                    padding=padding))
    out = jax.block_until_ready(fwd(x, weight, gamma, beta))

    ref = _reference(x, weight, gamma, beta, stride=stride, padding=padding)
    assert out.shape == ref.shape == (N, C_out, H, W)
    # bf16 MXU inputs + bf16 intermediate (f32 accumulation / stats / epilogue).
    assert jnp.allclose(out, ref, atol=3e-2, rtol=3e-2), "mismatch vs reference"

    print("KERNEL_OK")
</pallas_src>

<mosaic_0001>
module attributes {stable_mosaic.version = 11 : i64} {
  func.func @_conv_stats_kernel(%arg0: i32, %arg1: memref<1x18x18x4xbf16, #tpu.memory_space<vmem>>, %arg2: memref<3x3x8x4xbf16, #tpu.memory_space<vmem>>, %arg3: memref<1x8x256xbf16, #tpu.memory_space<vmem>>, %arg4: memref<1x8x2xf32, #tpu.memory_space<vmem>>) attributes {dimension_semantics = [#tpu.dimension_semantics<parallel>], iteration_bounds = array<i64: 2>, scalar_prefetch = 0 : i64, scratch_operands = 0 : i64, tpu.core_type = #tpu.core_type<tc>, window_params = [{transform_indices = @transform_0, window_bounds = array<i64: 1, 18, 18, 4>}, {pipeline_mode = #tpu.pipeline_mode<synchronous>, transform_indices = @transform_1, window_bounds = array<i64: 3, 3, 8, 4>}, {transform_indices = @transform_2, window_bounds = array<i64: 1, 8, 256>}, {transform_indices = @transform_3, window_bounds = array<i64: 1, 8, 2>}]} {
    %cst = arith.constant 0.000000e+00 : f32
    %0 = vector.broadcast %cst : f32 to vector<8x256xf32>
    %c0 = arith.constant 0 : index
    %c0_0 = arith.constant 0 : index
    %c0_1 = arith.constant 0 : index
    %c0_2 = arith.constant 0 : index
    %1 = vector.load %arg1[%c0, %c0_0, %c0_1, %c0_2] : memref<1x18x18x4xbf16, #tpu.memory_space<vmem>>, vector<1x16x16x4xbf16>
    %2 = vector.shape_cast %1 : vector<1x16x16x4xbf16> to vector<16x16x4xbf16>
    %3 = vector.shape_cast %2 : vector<16x16x4xbf16> to vector<256x4xbf16>
    %c0_3 = arith.constant 0 : index
    %c0_4 = arith.constant 0 : index
    %c0_5 = arith.constant 0 : index
    %c0_6 = arith.constant 0 : index
    %4 = vector.load %arg2[%c0_3, %c0_4, %c0_5, %c0_6] : memref<3x3x8x4xbf16, #tpu.memory_space<vmem>>, vector<1x1x8x4xbf16>
    %5 = vector.shape_cast %4 : vector<1x1x8x4xbf16> to vector<8x4xbf16>
    %cst_7 = arith.constant dense<0.000000e+00> : vector<8x256xf32>
    %6 = tpu.matmul %5, %3, %cst_7 {dimension_numbers = #tpu.dot_dimension_numbers<[1], [1], [0], [0], [0, 0, 1, 0], [], []>} : vector<8x4xbf16>, vector<256x4xbf16>, vector<8x256xf32> -> vector<8x256xf32>
    %7 = arith.addf %0, %6 : vector<8x256xf32>
    %c0_8 = arith.constant 0 : index
    %c0_9 = arith.constant 0 : index
    %c1 = arith.constant 1 : index
    %c0_10 = arith.constant 0 : index
    %8 = vector.load %arg1[%c0_8, %c0_9, %c1, %c0_10] : memref<1x18x18x4xbf16, #tpu.memory_space<vmem>>, vector<1x16x16x4xbf16>
    %9 = vector.shape_cast %8 : vector<1x16x16x4xbf16> to vector<16x16x4xbf16>
    %10 = vector.shape_cast %9 : vector<16x16x4xbf16> to vector<256x4xbf16>
    %c0_11 = arith.constant 0 : index
    %c1_12 = arith.constant 1 : index
    %c0_13 = arith.constant 0 : index
    %c0_14 = arith.constant 0 : index
    %11 = vector.load %arg2[%c0_11, %c1_12, %c0_13, %c0_14] : memref<3x3x8x4xbf16, #tpu.memory_space<vmem>>, vector<1x1x8x4xbf16>
    %12 = vector.shape_cast %11 : vector<1x1x8x4xbf16> to vector<8x4xbf16>
    %cst_15 = arith.constant dense<0.000000e+00> : vector<8x256xf32>
    %13 = tpu.matmul %12, %10, %cst_15 {dimension_numbers = #tpu.dot_dimension_numbers<[1], [1], [0], [0], [0, 0, 1, 0], [], []>} : vector<8x4xbf16>, vector<256x4xbf16>, vector<8x256xf32> -> vector<8x256xf32>
    %14 = arith.addf %7, %13 : vector<8x256xf32>
    %c0_16 = arith.constant 0 : index
    %c0_17 = arith.constant 0 : index
    %c2 = arith.constant 2 : index
    %c0_18 = arith.constant 0 : index
    %15 = vector.load %arg1[%c0_16, %c0_17, %c2, %c0_18] : memref<1x18x18x4xbf16, #tpu.memory_space<vmem>>, vector<1x16x16x4xbf16>
    %16 = vector.shape_cast %15 : vector<1x16x16x4xbf16> to vector<16x16x4xbf16>
    %17 = vector.shape_cast %16 : vector<16x16x4xbf16> to vector<256x4xbf16>
    %c0_19 = arith.constant 0 : index
    %c2_20 = arith.constant 2 : index
    %c0_21 = arith.constant 0 : index
    %c0_22 = arith.constant 0 : index
    %18 = vector.load %arg2[%c0_19, %c2_20, %c0_21, %c0_22] : memref<3x3x8x4xbf16, #tpu.memory_space<vmem>>, vector<1x1x8x4xbf16>
    %19 = vector.shape_cast %18 : vector<1x1x8x4xbf16> to vector<8x4xbf16>
    %cst_23 = arith.constant dense<0.000000e+00> : vector<8x256xf32>
    %20 = tpu.matmul %19, %17, %cst_23 {dimension_numbers = #tpu.dot_dimension_numbers<[1], [1], [0], [0], [0, 0, 1, 0], [], []>} : vector<8x4xbf16>, vector<256x4xbf16>, vector<8x256xf32> -> vector<8x256xf32>
    %21 = arith.addf %14, %20 : vector<8x256xf32>
    %c0_24 = arith.constant 0 : index
    %c1_25 = arith.constant 1 : index
    %c0_26 = arith.constant 0 : index
    %c0_27 = arith.constant 0 : index
    %22 = vector.load %arg1[%c0_24, %c1_25, %c0_26, %c0_27] : memref<1x18x18x4xbf16, #tpu.memory_space<vmem>>, vector<1x16x16x4xbf16>
    %23 = vector.shape_cast %22 : vector<1x16x16x4xbf16> to vector<16x16x4xbf16>
    %24 = vector.shape_cast %23 : vector<16x16x4xbf16> to vector<256x4xbf16>
    %c1_28 = arith.constant 1 : index
    %c0_29 = arith.constant 0 : index
    %c0_30 = arith.constant 0 : index
    %c0_31 = arith.constant 0 : index
    %25 = vector.load %arg2[%c1_28, %c0_29, %c0_30, %c0_31] : memref<3x3x8x4xbf16, #tpu.memory_space<vmem>>, vector<1x1x8x4xbf16>
    %26 = vector.shape_cast %25 : vector<1x1x8x4xbf16> to vector<8x4xbf16>
    %cst_32 = arith.constant dense<0.000000e+00> : vector<8x256xf32>
    %27 = tpu.matmul %26, %24, %cst_32 {dimension_numbers = #tpu.dot_dimension_numbers<[1], [1], [0], [0], [0, 0, 1, 0], [], []>} : vector<8x4xbf16>, vector<256x4xbf16>, vector<8x256xf32> -> vector<8x256xf32>
    %28 = arith.addf %21, %27 : vector<8x256xf32>
    %c0_33 = arith.constant 0 : index
    %c1_34 = arith.constant 1 : index
    %c1_35 = arith.constant 1 : index
    %c0_36 = arith.constant 0 : index
    %29 = vector.load %arg1[%c0_33, %c1_34, %c1_35, %c0_36] : memref<1x18x18x4xbf16, #tpu.memory_space<vmem>>, vector<1x16x16x4xbf16>
    %30 = vector.shape_cast %29 : vector<1x16x16x4xbf16> to vector<16x16x4xbf16>
    %31 = vector.shape_cast %30 : vector<16x16x4xbf16> to vector<256x4xbf16>
    %c1_37 = arith.constant 1 : index
    %c1_38 = arith.constant 1 : index
    %c0_39 = arith.constant 0 : index
    %c0_40 = arith.constant 0 : index
    %32 = vector.load %arg2[%c1_37, %c1_38, %c0_39, %c0_40] : memref<3x3x8x4xbf16, #tpu.memory_space<vmem>>, vector<1x1x8x4xbf16>
    %33 = vector.shape_cast %32 : vector<1x1x8x4xbf16> to vector<8x4xbf16>
    %cst_41 = arith.constant dense<0.000000e+00> : vector<8x256xf32>
    %34 = tpu.matmul %33, %31, %cst_41 {dimension_numbers = #tpu.dot_dimension_numbers<[1], [1], [0], [0], [0, 0, 1, 0], [], []>} : vector<8x4xbf16>, vector<256x4xbf16>, vector<8x256xf32> -> vector<8x256xf32>
    %35 = arith.addf %28, %34 : vector<8x256xf32>
    %c0_42 = arith.constant 0 : index
    %c1_43 = arith.constant 1 : index
    %c2_44 = arith.constant 2 : index
    %c0_45 = arith.constant 0 : index
    %36 = vector.load %arg1[%c0_42, %c1_43, %c2_44, %c0_45] : memref<1x18x18x4xbf16, #tpu.memory_space<vmem>>, vector<1x16x16x4xbf16>
    %37 = vector.shape_cast %36 : vector<1x16x16x4xbf16> to vector<16x16x4xbf16>
    %38 = vector.shape_cast %37 : vector<16x16x4xbf16> to vector<256x4xbf16>
    %c1_46 = arith.constant 1 : index
    %c2_47 = arith.constant 2 : index
    %c0_48 = arith.constant 0 : index
    %c0_49 = arith.constant 0 : index
    %39 = vector.load %arg2[%c1_46, %c2_47, %c0_48, %c0_49] : memref<3x3x8x4xbf16, #tpu.memory_space<vmem>>, vector<1x1x8x4xbf16>
    %40 = vector.shape_cast %39 : vector<1x1x8x4xbf16> to vector<8x4xbf16>
    %cst_50 = arith.constant dense<0.000000e+00> : vector<8x256xf32>
    %41 = tpu.matmul %40, %38, %cst_50 {dimension_numbers = #tpu.dot_dimension_numbers<[1], [1], [0], [0], [0, 0, 1, 0], [], []>} : vector<8x4xbf16>, vector<256x4xbf16>, vector<8x256xf32> -> vector<8x256xf32>
    %42 = arith.addf %35, %41 : vector<8x256xf32>
    %c0_51 = arith.constant 0 : index
    %c2_52 = arith.constant 2 : index
    %c0_53 = arith.constant 0 : index
    %c0_54 = arith.constant 0 : index
    %43 = vector.load %arg1[%c0_51, %c2_52, %c0_53, %c0_54] : memref<1x18x18x4xbf16, #tpu.memory_space<vmem>>, vector<1x16x16x4xbf16>
    %44 = vector.shape_cast %43 : vector<1x16x16x4xbf16> to vector<16x16x4xbf16>
    %45 = vector.shape_cast %44 : vector<16x16x4xbf16> to vector<256x4xbf16>
    %c2_55 = arith.constant 2 : index
    %c0_56 = arith.constant 0 : index
    %c0_57 = arith.constant 0 : index
    %c0_58 = arith.constant 0 : index
    %46 = vector.load %arg2[%c2_55, %c0_56, %c0_57, %c0_58] : memref<3x3x8x4xbf16, #tpu.memory_space<vmem>>, vector<1x1x8x4xbf16>
    %47 = vector.shape_cast %46 : vector<1x1x8x4xbf16> to vector<8x4xbf16>
    %cst_59 = arith.constant dense<0.000000e+00> : vector<8x256xf32>
    %48 = tpu.matmul %47, %45, %cst_59 {dimension_numbers = #tpu.dot_dimension_numbers<[1], [1], [0], [0], [0, 0, 1, 0], [], []>} : vector<8x4xbf16>, vector<256x4xbf16>, vector<8x256xf32> -> vector<8x256xf32>
    %49 = arith.addf %42, %48 : vector<8x256xf32>
    %c0_60 = arith.constant 0 : index
    %c2_61 = arith.constant 2 : index
    %c1_62 = arith.constant 1 : index
    %c0_63 = arith.constant 0 : index
    %50 = vector.load %arg1[%c0_60, %c2_61, %c1_62, %c0_63] : memref<1x18x18x4xbf16, #tpu.memory_space<vmem>>, vector<1x16x16x4xbf16>
    %51 = vector.shape_cast %50 : vector<1x16x16x4xbf16> to vector<16x16x4xbf16>
    %52 = vector.shape_cast %51 : vector<16x16x4xbf16> to vector<256x4xbf16>
    %c2_64 = arith.constant 2 : index
    %c1_65 = arith.constant 1 : index
    %c0_66 = arith.constant 0 : index
    %c0_67 = arith.constant 0 : index
    %53 = vector.load %arg2[%c2_64, %c1_65, %c0_66, %c0_67] : memref<3x3x8x4xbf16, #tpu.memory_space<vmem>>, vector<1x1x8x4xbf16>
    %54 = vector.shape_cast %53 : vector<1x1x8x4xbf16> to vector<8x4xbf16>
    %cst_68 = arith.constant dense<0.000000e+00> : vector<8x256xf32>
    %55 = tpu.matmul %54, %52, %cst_68 {dimension_numbers = #tpu.dot_dimension_numbers<[1], [1], [0], [0], [0, 0, 1, 0], [], []>} : vector<8x4xbf16>, vector<256x4xbf16>, vector<8x256xf32> -> vector<8x256xf32>
    %56 = arith.addf %49, %55 : vector<8x256xf32>
    %c0_69 = arith.constant 0 : index
    %c2_70 = arith.constant 2 : index
    %c2_71 = arith.constant 2 : index
    %c0_72 = arith.constant 0 : index
    %57 = vector.load %arg1[%c0_69, %c2_70, %c2_71, %c0_72] : memref<1x18x18x4xbf16, #tpu.memory_space<vmem>>, vector<1x16x16x4xbf16>
    %58 = vector.shape_cast %57 : vector<1x16x16x4xbf16> to vector<16x16x4xbf16>
    %59 = vector.shape_cast %58 : vector<16x16x4xbf16> to vector<256x4xbf16>
    %c2_73 = arith.constant 2 : index
    %c2_74 = arith.constant 2 : index
    %c0_75 = arith.constant 0 : index
    %c0_76 = arith.constant 0 : index
    %60 = vector.load %arg2[%c2_73, %c2_74, %c0_75, %c0_76] : memref<3x3x8x4xbf16, #tpu.memory_space<vmem>>, vector<1x1x8x4xbf16>
    %61 = vector.shape_cast %60 : vector<1x1x8x4xbf16> to vector<8x4xbf16>
    %cst_77 = arith.constant dense<0.000000e+00> : vector<8x256xf32>
    %62 = tpu.matmul %61, %59, %cst_77 {dimension_numbers = #tpu.dot_dimension_numbers<[1], [1], [0], [0], [0, 0, 1, 0], [], []>} : vector<8x4xbf16>, vector<256x4xbf16>, vector<8x256xf32> -> vector<8x256xf32>
    %63 = arith.addf %56, %62 : vector<8x256xf32>
    %64 = arith.truncf %63 : vector<8x256xf32> to vector<8x256xbf16>
    %c0_78 = arith.constant 0 : index
    %c0_79 = arith.constant 0 : index
    %c0_80 = arith.constant 0 : index
    %65 = vector.load %arg3[%c0_78, %c0_79, %c0_80] : memref<1x8x256xbf16, #tpu.memory_space<vmem>>, vector<1x8x256xbf16>
    %66 = vector.shape_cast %65 : vector<1x8x256xbf16> to vector<8x256xbf16>
    %67 = vector.shape_cast %64 : vector<8x256xbf16> to vector<1x8x256xbf16>
    tpu.vector_store %arg3[%c0_78, %c0_79, %c0_80], %67 {strides = array<i32>} : memref<1x8x256xbf16, #tpu.memory_space<vmem>>, vector<1x8x256xbf16>,
    %cst_81 = arith.constant dense<0.000000e+00> : vector<8xf32>
    %68 = vector.multi_reduction <add>, %63, %cst_81 [1] : vector<8x256xf32> to vector<8xf32>
    %69 = vector.shape_cast %68 : vector<8xf32> to vector<8x1xf32>
    %c0_82 = arith.constant 0 : index
    %c0_83 = arith.constant 0 : index
    %c0_84 = arith.constant 0 : index
    %70 = vector.load %arg4[%c0_82, %c0_83, %c0_84] : memref<1x8x2xf32, #tpu.memory_space<vmem>>, vector<1x8x1xf32>
    %71 = vector.shape_cast %70 : vector<1x8x1xf32> to vector<8x1xf32>
    %72 = vector.shape_cast %69 : vector<8x1xf32> to vector<1x8x1xf32>
    tpu.vector_store %arg4[%c0_82, %c0_83, %c0_84], %72 {strides = array<i32>} : memref<1x8x2xf32, #tpu.memory_space<vmem>>, vector<1x8x1xf32>,
    %73 = arith.mulf %63, %63 : vector<8x256xf32>
    %cst_85 = arith.constant dense<0.000000e+00> : vector<8xf32>
    %74 = vector.multi_reduction <add>, %73, %cst_85 [1] : vector<8x256xf32> to vector<8xf32>
    %75 = vector.shape_cast %74 : vector<8xf32> to vector<8x1xf32>
    %c0_86 = arith.constant 0 : index
    %c0_87 = arith.constant 0 : index
    %c1_88 = arith.constant 1 : index
    %76 = vector.load %arg4[%c0_86, %c0_87, %c1_88] : memref<1x8x2xf32, #tpu.memory_space<vmem>>, vector<1x8x1xf32>
    %77 = vector.shape_cast %76 : vector<1x8x1xf32> to vector<8x1xf32>
    %78 = vector.shape_cast %75 : vector<8x1xf32> to vector<1x8x1xf32>
    tpu.vector_store %arg4[%c0_86, %c0_87, %c1_88], %78 {strides = array<i32>} : memref<1x8x2xf32, #tpu.memory_space<vmem>>, vector<1x8x1xf32>,
    return
  }
  func.func @transform_0(%arg0: i32) -> (i32, i32, i32, i32) {
    %c0_i32 = arith.constant 0 : i32
    %c0_i32_0 = arith.constant 0 : i32
    %c0_i32_1 = arith.constant 0 : i32
    %c0_i32_2 = arith.constant 0 : i32
    return %arg0, %c0_i32, %c0_i32_0, %c0_i32_1 : i32, i32, i32, i32
  }
  func.func @transform_1(%arg0: i32) -> (i32, i32, i32, i32) {
    %c0_i32 = arith.constant 0 : i32
    %c0_i32_0 = arith.constant 0 : i32
    %c0_i32_1 = arith.constant 0 : i32
    %c0_i32_2 = arith.constant 0 : i32
    %c0_i32_3 = arith.constant 0 : i32
    return %c0_i32, %c0_i32_0, %c0_i32_1, %c0_i32_2 : i32, i32, i32, i32
  }
  func.func @transform_2(%arg0: i32) -> (i32, i32, i32) {
    %c0_i32 = arith.constant 0 : i32
    %c0_i32_0 = arith.constant 0 : i32
    %c0_i32_1 = arith.constant 0 : i32
    return %arg0, %c0_i32, %c0_i32_0 : i32, i32, i32
  }
  func.func @transform_3(%arg0: i32) -> (i32, i32, i32) {
    %c0_i32 = arith.constant 0 : i32
    %c0_i32_0 = arith.constant 0 : i32
    %c0_i32_1 = arith.constant 0 : i32
    return %arg0, %c0_i32, %c0_i32_0 : i32, i32, i32
  }
}

module attributes {stable_mosaic.version = 11 : i64} {
  func.func @_bn_act_kernel(%arg0: i32, %arg1: i32, %arg2: memref<16x256xbf16, #tpu.memory_space<vmem>>, %arg3: memref<16x1xf32, #tpu.memory_space<vmem>>, %arg4: memref<16x1xf32, #tpu.memory_space<vmem>>, %arg5: memref<16x256xf32, #tpu.memory_space<vmem>>) attributes {dimension_semantics = [#tpu.dimension_semantics<parallel>, #tpu.dimension_semantics<parallel>], iteration_bounds = array<i64: 1, 1>, scalar_prefetch = 0 : i64, scratch_operands = 0 : i64, tpu.core_type = #tpu.core_type<tc>, window_params = [{transform_indices = @transform_0, window_bounds = array<i64: 16, 256>}, {transform_indices = @transform_1, window_bounds = array<i64: 16, 1>}, {transform_indices = @transform_2, window_bounds = array<i64: 16, 1>}, {transform_indices = @transform_3, window_bounds = array<i64: 16, 256>}]} {
    %c0 = arith.constant 0 : index
    %c0_0 = arith.constant 0 : index
    %0 = vector.load %arg2[%c0, %c0_0] : memref<16x256xbf16, #tpu.memory_space<vmem>>, vector<16x256xbf16>
    %1 = arith.extf %0 : vector<16x256xbf16> to vector<16x256xf32>
    %c0_1 = arith.constant 0 : index
    %c0_2 = arith.constant 0 : index
    %2 = vector.load %arg3[%c0_1, %c0_2] : memref<16x1xf32, #tpu.memory_space<vmem>>, vector<16x1xf32>
    %3 = vector.broadcast %2 : vector<16x1xf32> to vector<16x256xf32>
    %4 = arith.mulf %1, %3 : vector<16x256xf32>
    %c0_3 = arith.constant 0 : index
    %c0_4 = arith.constant 0 : index
    %5 = vector.load %arg4[%c0_3, %c0_4] : memref<16x1xf32, #tpu.memory_space<vmem>>, vector<16x1xf32>
    %6 = vector.broadcast %5 : vector<16x1xf32> to vector<16x256xf32>
    %7 = arith.addf %4, %6 : vector<16x256xf32>
    %cst = arith.constant 0.000000e+00 : f32
    %8 = vector.broadcast %cst : f32 to vector<16x256xf32>
    %9 = arith.cmpf oge, %7, %8 : vector<16x256xf32>
    %cst_5 = arith.constant 1.000000e-01 : f32
    %10 = vector.broadcast %cst_5 : f32 to vector<16x256xf32>
    %11 = arith.mulf %10, %7 : vector<16x256xf32>
    %12 = arith.select %9, %7, %11 : vector<16x256xi1>, vector<16x256xf32>
    %c0_6 = arith.constant 0 : index
    %c0_7 = arith.constant 0 : index
    %13 = vector.load %arg5[%c0_6, %c0_7] : memref<16x256xf32, #tpu.memory_space<vmem>>, vector<16x256xf32>
    tpu.vector_store %arg5[%c0_6, %c0_7], %12 {strides = array<i32>} : memref<16x256xf32, #tpu.memory_space<vmem>>, vector<16x256xf32>,
    return
  }
  func.func @transform_0(%arg0: i32, %arg1: i32) -> (i32, i32) {
    %c0_i32 = arith.constant 0 : i32
    return %arg0, %arg1 : i32, i32
  }
  func.func @transform_1(%arg0: i32, %arg1: i32) -> (i32, i32) {
    %c0_i32 = arith.constant 0 : i32
    %c0_i32_0 = arith.constant 0 : i32
    return %arg0, %c0_i32 : i32, i32
  }
  func.func @transform_2(%arg0: i32, %arg1: i32) -> (i32, i32) {
    %c0_i32 = arith.constant 0 : i32
    %c0_i32_0 = arith.constant 0 : i32
    return %arg0, %c0_i32 : i32, i32
  }
  func.func @transform_3(%arg0: i32, %arg1: i32) -> (i32, i32) {
    %c0_i32 = arith.constant 0 : i32
    return %arg0, %arg1 : i32, i32
  }
}

</mosaic_0001>

<llo_original>
// kernel: tile.13
$region0: #{tile.13}
  #allocation0 [shape = 's32[1]{0}', space=sflag, size = 0x4, scoped, tag = 'scoped memory for tile.13']
  %s0 = inlined_call_operand.vmem [shape: f32[8], index: 0, kind: input, shape index: {}]
  %s1 = inlined_call_operand.vmem [shape: f32[2,8], index: 1, kind: output, shape index: {}]
  // Predicated region
  $region2: #{tile.13} parent=0 // pred_check
    _
  $region3: #{tile.13} parent=0 // pred_check_branch
    %3 = sbr.rel (0) target = $region5
  $region4: #{tile.13} parent=0 // pred_region
    _
  $region5: #{tile.13} parent=0 // pred_fallthru
    _
  %v4 = vld [vmem:[%s0] ss:$0 sm:$0xff]
  %5 = vst [vmem:[%s1] sm:$0x3] %v4

// kernel: tile.0
$region0: #{tile.0}
  %s0 = inlined_call_operand.vmem [shape: f32[2,8], index: 0, kind: input, shape index: {}]
  %s1 = inlined_call_operand.vmem [shape: f32[16,1], index: 1, kind: output, shape index: {}]
  $region1: #{tile.0} parent=0
    #allocation0 [shape = 'u8[4096]{0}', space=vmem, size = 0x1000, scoped, tag = 'scoped mem for input reshape']
    %s3 = sshllo.u32 0, 2
    %v4 = vld [vmem:[%s0] sm:%s3]
    %5 = vst [vmem:[#allocation0] sm:%s3] %v4
    %v6 = vld [vmem:[#allocation0] sm:$0x3]
    %vm7 = vcmask 7168
    %8 = vst.msk [vmem:[%s1] ss:$8 sm:$0x3] %vm7, %v6
    %v9 = vld [vmem:[#allocation0] sm:$0x3]
    %10 = vrot.lane.b32.xlu0 %v9, 127
    %v11 = vpop.permute.xlu0 %10
    %vm12 = vcmask 7168
    %s13 = scalar_lea.vmem %s1, 1
    %14 = vst.msk [vmem:[%s13] ss:$8 sm:$0x3] %vm12, %v11
    %v15 = vld [vmem:[#allocation0] sm:$0x3]
    %16 = vrot.lane.b32.xlu0 %v15, 126
    %v17 = vpop.permute.xlu0 %16
    %vm18 = vcmask 7168
    %s19 = scalar_lea.vmem %s1, 2
    %20 = vst.msk [vmem:[%s19] ss:$8 sm:$0x3] %vm18, %v17
    %v21 = vld [vmem:[#allocation0] sm:$0x3]
    %22 = vrot.lane.b32.xlu0 %v21, 125
    %v23 = vpop.permute.xlu0 %22
    %vm24 = vcmask 7168
    %s25 = scalar_lea.vmem %s1, 3
    %26 = vst.msk [vmem:[%s25] ss:$8 sm:$0x3] %vm24, %v23
    %v27 = vld [vmem:[#allocation0] sm:$0x3]
    %28 = vrot.lane.b32.xlu0 %v27, 124
    %v29 = vpop.permute.xlu0 %28
    %vm30 = vcmask 7168
    %s31 = scalar_lea.vmem %s1, 4
    %32 = vst.msk [vmem:[%s31] ss:$8 sm:$0x3] %vm30, %v29
    %v33 = vld [vmem:[#allocation0] sm:$0x3]
    %34 = vrot.lane.b32.xlu0 %v33, 123
    %v35 = vpop.permute.xlu0 %34
    %vm36 = vcmask 7168
    %s37 = scalar_lea.vmem %s1, 5
    %38 = vst.msk [vmem:[%s37] ss:$8 sm:$0x3] %vm36, %v35
    %v39 = vld [vmem:[#allocation0] sm:$0x3]
    %40 = vrot.lane.b32.xlu0 %v39, 122
    %v41 = vpop.permute.xlu0 %40
    %vm42 = vcmask 7168
    %s43 = scalar_lea.vmem %s1, 6
    %44 = vst.msk [vmem:[%s43] ss:$8 sm:$0x3] %vm42, %v41
    %v45 = vld [vmem:[#allocation0] sm:$0x3]
    %46 = vrot.lane.b32.xlu0 %v45, 121
    %v47 = vpop.permute.xlu0 %46
    %vm48 = vcmask 7168
    %s49 = scalar_lea.vmem %s1, 7
    %50 = vst.msk [vmem:[%s49] ss:$8 sm:$0x3] %vm48, %v47

// kernel: conv_block_forward.3
$region0: #{conv_block_forward.3}
  #allocation0 [shape = 'u32[]', space=smem, size = 0x4, offset = 0x4, fixed_abs, tag = 'smem constant byte address 0x4 - core index']
  #allocation1 [shape = 'u32[144,128]{1,0:T(1,128)}', space=vmem, size = 0x12000, scoped, tag = 'internal scratch']
  %s0 = inlined_call_operand.vmem [shape: bf16[16,256], index: 0, kind: input, shape index: {}]
  %s1 = inlined_call_operand.vmem [shape: f32[16,1], index: 1, kind: input, shape index: {}]
  %s2 = inlined_call_operand.vmem [shape: f32[16,1], index: 2, kind: input, shape index: {}]
  %s3 = inlined_call_operand.vmem [shape: f32[16,256], index: 3, kind: output, shape index: {}]
  %s4 = sld [smem:[#allocation0]]
  $region22: #{conv_block_forward.3} parent=0
    _
  %s6 = ssub.s32 1, %s4
  %s7 = scalar_select 0, %s6, %s4
  // Predicated region
  $region2: #{conv_block_forward.3} parent=0 // pred_check
    _
  $region3: #{conv_block_forward.3} parent=0 // pred_check_branch
    %9 = sbr.rel (0) target = $region5
  $region4: #{conv_block_forward.3} parent=0 // pred_region
    _
  $region5: #{conv_block_forward.3} parent=0 // pred_fallthru
    _
  // Predicated region
  $region6: #{conv_block_forward.3} parent=0 // pred_check
    _
  $region7: #{conv_block_forward.3} parent=0 // pred_check_branch
    %11 = sbr.rel (0) target = $region9
  $region8: #{conv_block_forward.3} parent=0 // pred_region
    _
  $region9: #{conv_block_forward.3} parent=0 // pred_fallthru
    _
  // Predicated region
  $region10: #{conv_block_forward.3} parent=0 // pred_check
    _
  $region11: #{conv_block_forward.3} parent=0 // pred_check_branch
    %13 = sbr.rel (0) target = $region13
  $region12: #{conv_block_forward.3} parent=0 // pred_region
    _
  $region13: #{conv_block_forward.3} parent=0 // pred_fallthru
    _
  %v14 = vld [vmem:[%s0] sm:$0xff]
  %v15 = vld [vmem:[%s0 + $0x8] sm:$0xff]
  %v16 = vunpack.c.l.bf16 %v14
  %v17 = vunpack.c.h.bf16 %v14
  %v18 = vunpack.c.l.bf16 %v15
  %v19 = vunpack.c.h.bf16 %v15
  %v20 = vld [vmem:[%s1] sm:$0xff]
  %v21 = vld [vmem:[%s1 + $0x8] sm:$0xff]
  %23 = vset.pattern.permute.xlu0 0
  %24 = vperm.xlu0 %23, %v20
  %v25 = vpop.permute.xlu0 %24
  %28 = vset.pattern.permute.xlu0 0
  %29 = vperm.xlu0 %28, %v21
  %v30 = vpop.permute.xlu0 %29
  %v32 = vmul.f32 %v16, %v25
  %v33 = vmul.f32 %v17, %v25
  %v34 = vmul.f32 %v18, %v30
  %v35 = vmul.f32 %v19, %v30
  %v36 = vld [vmem:[%s2] sm:$0xff]
  %v37 = vld [vmem:[%s2 + $0x8] sm:$0xff]
  %39 = vset.pattern.permute.xlu0 0
  %40 = vperm.xlu0 %39, %v36
  %v41 = vpop.permute.xlu0 %40
  %44 = vset.pattern.permute.xlu0 0
  %45 = vperm.xlu0 %44, %v37
  %v46 = vpop.permute.xlu0 %45
  %v48 = vadd.f32 %v32, %v41
  %v49 = vadd.f32 %v33, %v41
  %v50 = vadd.f32 %v34, %v46
  %v51 = vadd.f32 %v35, %v46
  %vm52 = vcmp.ge.f32.partialorder %v48, 0.0
  %vm53 = vcmp.ge.f32.partialorder %v49, 0.0
  %vm54 = vcmp.ge.f32.partialorder %v50, 0.0
  %vm55 = vcmp.ge.f32.partialorder %v51, 0.0
  %v56 = vmul.f32 %v48, 0.1
  %v57 = vmul.f32 %v49, 0.1
  %v58 = vmul.f32 %v50, 0.1
  %v59 = vmul.f32 %v51, 0.1
  %v60 = vsel %vm52, %v48, %v56
  %v61 = vsel %vm53, %v49, %v57
  %v62 = vsel %vm54, %v50, %v58
  %v63 = vsel %vm55, %v51, %v59
  %64 = vst [vmem:[%s3] sm:$0xff] %v60
  %65 = vst [vmem:[%s3 + $0x8] sm:$0xff] %v61
  %66 = vst [vmem:[%s3 + $0x10] sm:$0xff] %v62
  %67 = vst [vmem:[%s3 + $0x18] sm:$0xff] %v63
  // Predicated region
  $region14: #{conv_block_forward.3} parent=0 // pred_check
    _
  $region15: #{conv_block_forward.3} parent=0 // pred_check_branch
    %69 = sbr.rel (0) target = $region17
  $region16: #{conv_block_forward.3} parent=0 // pred_region
    _
  $region17: #{conv_block_forward.3} parent=0 // pred_fallthru
    _
  // Predicated region
  $region18: #{conv_block_forward.3} parent=0 // pred_check
    _
  $region19: #{conv_block_forward.3} parent=0 // pred_check_branch
    %71 = sbr.rel (0) target = $region21
  $region20: #{conv_block_forward.3} parent=0 // pred_region
    _
  $region21: #{conv_block_forward.3} parent=0 // pred_fallthru
    _

// kernel: conv_block_forward.2
$region0: #{conv_block_forward.2}
  #allocation0 [shape = 'u32[]', space=smem, size = 0x4, offset = 0x4, fixed_abs, tag = 'smem constant byte address 0x4 - core index']
  #allocation1 [shape = 'u32[144,128]{1,0:T(1,128)}', space=vmem, size = 0x12000, scoped, tag = 'internal scratch']
  %s0 = inlined_call_operand.vmem [shape: bf16[2,18,18,4], index: 0, kind: input, shape index: {}]
  %s1 = inlined_call_operand.vmem [shape: bf16[3,3,8,4], index: 1, kind: input, shape index: {}]
  %s2 = inlined_call_operand.vmem [shape: bf16[2,8,256], index: 2, kind: output, shape index: {0}]
  %s3 = inlined_call_operand.vmem [shape: f32[2,8,2], index: 3, kind: output, shape index: {1}]
  %4 = xla_tuple %s2, %s3
  %s5 = sld [smem:[#allocation0]]
  $region49: #{conv_block_forward.2} parent=0
    _
  %s7 = ssub.s32 1, %s5
  %s8 = scalar_select 0, %s7, %s5
  loop: start=0, step=1, limit=4
  $region2: #{conv_block_forward.2} parent=0 // loop_pre_header
    _
  $region3: #{conv_block_forward.2} parent=0 // loop_header
    %s10 = sphi 0, %s14
    %p11 = scmp.ge.s32.totalorder %s10, 4
    %s20 = sphi 0, %s22
    %s23 = sphi 0, %s20
    %s24 = sphi 0, %s23
    %s40 = sphi 0, %s24
    %s44 = sphi 0, %s44
    %s46 = sphi 0, %s44
    %s47 = sphi 0, %s46
    %s61 = sphi 0, %s47
    %s67 = sphi 0, %s69
    %s70 = sphi 0, %s67
    %s71 = sphi 0, %s70
    %s87 = sphi 0, %s71
    %s93 = sphi 0, %s95
    %s96 = sphi 0, %s93
    %s97 = sphi 0, %s96
    %s113 = sphi 0, %s97
  $region4: #{conv_block_forward.2} parent=0 // loop_header_branch
    %13 = sbr.rel (%p11) target = $region8
  $region5: #{conv_block_forward.2} parent=0 // loop_body
    %s15 = ssub.s32 %s10, 1
    %s16 = ssub.s32 %s10, 2
    %s17 = sadd.s32 %s10, 1
    %s18 = ssub.s32 %s10, %s17
    %p19 = scmp.eq.s32.totalorder %s18, 0
    %s21 = sadd.s32 %s20, 1
    %s22 = scalar_select %p19, %s20, %s21
    %p25 = pneg %p19
    %p26 = scmp.eq.s32.totalorder %s10, 1
    %p27 = por %p25, %p26
    %p28 = scmp.ne.s32.totalorder %s20, %s23
    %p29 = scmp.eq.s32.totalorder %s10, 0
    %p30 = por %p28, %p29
    %p31 = scmp.ne.s32.totalorder %s20, %s23
    %p32 = scmp.eq.s32.totalorder %s15, 1
    %p33 = por %p31, %p32
    %p34 = scmp.ne.s32.totalorder %s23, %s24
    %p35 = scmp.eq.s32.totalorder %s15, 0
    %p36 = por %p34, %p35
    %p37 = scmp.ne.s32.totalorder %s23, %s24
    %p38 = scmp.eq.s32.totalorder %s16, 1
    %p39 = por %p37, %p38
    %p41 = scmp.ne.s32.totalorder %s24, %s40
    %p42 = scmp.eq.s32.totalorder %s16, 0
    %p43 = por %p41, %p42
    %s45 = sadd.s32 %s44, 1
    %p48 = scmp.eq.s32.totalorder %s10, 1
    %p49 = scmp.ne.s32.totalorder %s44, %s46
    %p50 = scmp.eq.s32.totalorder %s10, 0
    %p51 = por %p49, %p50
    %p52 = scmp.ne.s32.totalorder %s44, %s46
    %p53 = scmp.eq.s32.totalorder %s15, 1
    %p54 = por %p52, %p53
    %p55 = scmp.ne.s32.totalorder %s46, %s47
    %p56 = scmp.eq.s32.totalorder %s15, 0
    %p57 = por %p55, %p56
    %p58 = scmp.ne.s32.totalorder %s46, %s47
    %p59 = scmp.eq.s32.totalorder %s16, 1
    %p60 = por %p58, %p59
    %p62 = scmp.ne.s32.totalorder %s47, %s61
    %p63 = scmp.eq.s32.totalorder %s16, 0
    %p64 = por %p62, %p63
    %s65 = ssub.s32 %s10, %s17
    %p66 = scmp.eq.s32.totalorder %s65, 0
    %s68 = sadd.s32 %s67, 1
    %s69 = scalar_select %p66, %s67, %s68
    %p72 = pneg %p66
    %p73 = scmp.eq.s32.totalorder %s10, 1
    %p74 = por %p72, %p73
    %p75 = scmp.ne.s32.totalorder %s67, %s70
    %p76 = scmp.eq.s32.totalorder %s10, 0
    %p77 = por %p75, %p76
    %p78 = scmp.ne.s32.totalorder %s67, %s70
    %p79 = scmp.eq.s32.totalorder %s15, 1
    %p80 = por %p78, %p79
    %p81 = scmp.ne.s32.totalorder %s70, %s71
    %p82 = scmp.eq.s32.totalorder %s15, 0
    %p83 = por %p81, %p82
    %p84 = scmp.ne.s32.totalorder %s70, %s71
    %p85 = scmp.eq.s32.totalorder %s16, 1
    %p86 = por %p84, %p85
    %p88 = scmp.ne.s32.totalorder %s71, %s87
    %p89 = scmp.eq.s32.totalorder %s16, 0
    %p90 = por %p88, %p89
    %s91 = ssub.s32 %s10, %s17
    %p92 = scmp.eq.s32.totalorder %s91, 0
    %s94 = sadd.s32 %s93, 1
    %s95 = scalar_select %p92, %s93, %s94
    %p98 = pneg %p92
    %p99 = scmp.eq.s32.totalorder %s10, 1
    %p100 = por %p98, %p99
    %p101 = scmp.ne.s32.totalorder %s93, %s96
    %p102 = scmp.eq.s32.totalorder %s10, 0
    %p103 = por %p101, %p102
    %p104 = scmp.ne.s32.totalorder %s93, %s96
    %p105 = scmp.eq.s32.totalorder %s15, 1
    %p106 = por %p104, %p105
    %p107 = scmp.ne.s32.totalorder %s96, %s97
    %p108 = scmp.eq.s32.totalorder %s15, 0
    %p109 = por %p107, %p108
    %p110 = scmp.ne.s32.totalorder %s96, %s97
    %p111 = scmp.eq.s32.totalorder %s16, 1
    %p112 = por %p110, %p111
    %p114 = scmp.ne.s32.totalorder %s97, %s113
    %p115 = scmp.eq.s32.totalorder %s16, 0
    %p116 = por %p114, %p115
    %p117 = scmp.le.s32.totalorder 1, %s10
    %p118 = scmp.lt.s32.totalorder %s10, 3
    %p119 = pnand %p117, %p118
    %p120 = pneg %p119
    // Predicated region
    $region9: #{conv_block_forward.2} parent=5 // pred_check
      _
    $region10: #{conv_block_forward.2} parent=5 // pred_check_branch
      %122 = sbr.rel (%p119) target = $region12
    $region11: #{conv_block_forward.2} parent=5 // pred_region
      %s123 = ssub.s32 %s10, 1
      // Predicated region
      $region13: #{conv_block_forward.2} parent=11 // pred_check
        %p124 = pneg %p57
      $region14: #{conv_block_forward.2} parent=11 // pred_check_branch
        %126 = sbr.rel (%p124) target = $region16
      $region15: #{conv_block_forward.2} parent=11 // pred_region
        _
      $region16: #{conv_block_forward.2} parent=11 // pred_fallthru
        _
    $region12: #{conv_block_forward.2} parent=5 // pred_fallthru
      _
    %p127 = scmp.lt.s32.totalorder %s10, 2
    // Predicated region
    $region17: #{conv_block_forward.2} parent=5 // pred_check
      %p128 = pneg %p127
    $region18: #{conv_block_forward.2} parent=5 // pred_check_branch
      %130 = sbr.rel (%p128) target = $region20
    $region19: #{conv_block_forward.2} parent=5 // pred_region
      // Predicated region
      $region21: #{conv_block_forward.2} parent=19 // pred_check
        %p131 = pneg %p30
      $region22: #{conv_block_forward.2} parent=19 // pred_check_branch
        %133 = sbr.rel (%p131) target = $region24
      $region23: #{conv_block_forward.2} parent=19 // pred_region
        %p134 = scmp.lt.s32.totalorder %s10, 1
        %s135 = scalar_select %p134, %s10, 1
        %s136 = smul.addr %s135, 54
        %s137 = smul.addr %s136, 4
        %s138 = scalar_lea.vmem %s0, %s137
      $region24: #{conv_block_forward.2} parent=19 // pred_fallthru
        _
    $region20: #{conv_block_forward.2} parent=5 // pred_fallthru
      _
    %p139 = scmp.le.s32.totalorder 1, %s10
    %p140 = scmp.lt.s32.totalorder %s10, 3
    %p141 = pnand %p139, %p140
    %p142 = pneg %p141
    // Predicated region
    $region25: #{conv_block_forward.2} parent=5 // pred_check
      _
    $region26: #{conv_block_forward.2} parent=5 // pred_check_branch
      %144 = sbr.rel (%p141) target = $region28
    $region27: #{conv_block_forward.2} parent=5 // pred_region
      %s145 = ssub.s32 %s10, 1
      %p146 = scmp.lt.s32.totalorder %s15, 1
      %s147 = scalar_select %p146, %s15, 1
      %s148 = smul.addr %s147, 54
      %s149 = smul.addr %s148, 4
      %s150 = scalar_lea.vmem %s0, %s149
      %p151 = pneg %p36
      %p152 = pneg %p33
      %p153 = pneg %p57
      %p154 = pneg %p54
      %p155 = pneg %p83
      %p156 = pneg %p80
      %p157 = scmp.lt.s32.totalorder %s15, 1
      %s158 = scalar_select %p157, %s15, 1
      %s159 = smul.addr %s158, 2
      %s160 = smul.addr %s159, 4
      %s161 = scalar_lea.vmem %s2, %s160
      %p162 = pneg %p109
      %p163 = pneg %p106
      %p164 = scmp.lt.s32.totalorder %s15, 1
      %s165 = scalar_select %p164, %s15, 1
      %s166 = smul.addr %s165, 8
      %s167 = scalar_lea.vmem %s3, %s166
      %p168 = scmp.lt.s32.totalorder %s15, 1
      %s169 = scalar_select %p168, %s15, 1
      %s170 = smul.addr %s169, 54
      %s171 = smul.addr %s170, 4
      %s172 = scalar_lea.vmem %s0, %s171
      %p173 = scmp.lt.s32.totalorder %s15, 1
      %s174 = scalar_select %p173, %s15, 1
      %s175 = smul.addr %s174, 2
      %s176 = smul.addr %s175, 4
      %s177 = scalar_lea.vmem %s2, %s176
      %p178 = scmp.lt.s32.totalorder %s15, 1
      %s179 = scalar_select %p178, %s15, 1
      %s180 = smul.addr %s179, 8
      %s181 = scalar_lea.vmem %s3, %s180
      %v183 = vld [vmem:[%s172] sm:$0xf]
      %v184 = vld [vmem:[%s172 + $0x4] sm:$0xf]
      %v185 = vld [vmem:[%s172 + $0xc] sm:$0xf]
      %v186 = vld [vmem:[%s172 + $0x10] sm:$0xf]
      %v187 = vld [vmem:[%s172 + $0x18] sm:$0xf]
      %v188 = vld [vmem:[%s172 + $0x1c] sm:$0xf]
      %v189 = vld [vmem:[%s172 + $0x24] sm:$0xf]
      %v190 = vld [vmem:[%s172 + $0x28] sm:$0xf]
      %v191 = vld [vmem:[%s172 + $0x30] sm:$0xf]
      %v192 = vld [vmem:[%s172 + $0x34] sm:$0xf]
      %v193 = vld [vmem:[%s172 + $0x3c] sm:$0xf]
      %v194 = vld [vmem:[%s172 + $0x40] sm:$0xf]
      %v195 = vld [vmem:[%s172 + $0x48] sm:$0xf]
      %v196 = vld [vmem:[%s172 + $0x4c] sm:$0xf]
      %v197 = vld [vmem:[%s172 + $0x54] sm:$0xf]
      %v198 = vld [vmem:[%s172 + $0x58] sm:$0xf]
      %v199 = vld [vmem:[%s172 + $0x60] sm:$0xf]
      %v200 = vld [vmem:[%s172 + $0x64] sm:$0xf]
      %v201 = vld [vmem:[%s172 + $0x6c] sm:$0xf]
      %v202 = vld [vmem:[%s172 + $0x70] sm:$0xf]
      %v203 = vld [vmem:[%s172 + $0x78] sm:$0xf]
      %v204 = vld [vmem:[%s172 + $0x7c] sm:$0xf]
      %v205 = vld [vmem:[%s172 + $0x84] sm:$0xf]
      %v206 = vld [vmem:[%s172 + $0x88] sm:$0xf]
      %v207 = vld [vmem:[%s172 + $0x90] sm:$0xf]
      %v208 = vld [vmem:[%s172 + $0x94] sm:$0xf]
      %v209 = vld [vmem:[%s172 + $0x9c] sm:$0xf]
      %v210 = vld [vmem:[%s172 + $0xa0] sm:$0xf]
      %v211 = vld [vmem:[%s172 + $0xa8] sm:$0xf]
      %v212 = vld [vmem:[%s172 + $0xac] sm:$0xf]
      %v213 = vld [vmem:[%s172 + $0xb4] sm:$0xf]
      %v214 = vld [vmem:[%s172 + $0xb8] sm:$0xf]
      %v215 = vld [vmem:[%s1] sm:$0xf]
      %v216 = vld [vmem:[%s172 + $0x8] sm:$0x1]
      %v217 = vld [vmem:[%s172 + $0x14] sm:$0x1]
      %v218 = vld [vmem:[%s172 + $0x20] sm:$0x1]
      %v219 = vld [vmem:[%s172 + $0x2c] sm:$0x1]
      %v220 = vld [vmem:[%s172 + $0x38] sm:$0x1]
      %v221 = vld [vmem:[%s172 + $0x44] sm:$0x1]
      %v222 = vld [vmem:[%s172 + $0x50] sm:$0x1]
      %v223 = vld [vmem:[%s172 + $0x5c] sm:$0x1]
      %v224 = vld [vmem:[%s172 + $0x68] sm:$0x1]
      %v225 = vld [vmem:[%s172 + $0x74] sm:$0x1]
      %v226 = vld [vmem:[%s172 + $0x80] sm:$0x1]
      %v227 = vld [vmem:[%s172 + $0x8c] sm:$0x1]
      %v228 = vld [vmem:[%s172 + $0x98] sm:$0x1]
      %v229 = vld [vmem:[%s172 + $0xa4] sm:$0x1]
      %v230 = vld [vmem:[%s172 + $0xb0] sm:$0x1]
      %v231 = vld [vmem:[%s172 + $0xbc] sm:$0x1]
      %vm232 = vsmask.f32 3328
      %vm233 = vsmask.f32 7440
      %vm234 = vmor %vm232, %vm233
      %v236 = vshrl.u32 %v183, 16
      %v238 = vrot.slane %v236, 4
      %v239 = vshll.u32 %v183, 16
      %v241 = vrot.slane %v239, 5
      %v242 = vor.u32 %v238, %v241
      %v243 = vrot.slane %v242, 4
      %v245 = vshll.u32 %v184, 16
      %v247 = vrot.slane %v245, 5
      %v248 = vsel %vm234, %v243, %v247
      %v249 = vshrl.u32 %v184, 16
      %v251 = vrot.slane %v249, 4
      %v252 = vor.u32 %v251, %v247
      %v253 = vrot.slane %v252, 4
      %v255 = vshll.u32 %v216, 16
      %v257 = vrot.slane %v255, 5
      %v258 = vsel %vm234, %v253, %v257
      %v260 = vshrl.u32 %v185, 16
      %v262 = vrot.slane %v260, 4
      %v263 = vshll.u32 %v185, 16
      %v265 = vrot.slane %v263, 5
      %v266 = vor.u32 %v262, %v265
      %v267 = vrot.slane %v266, 4
      %v269 = vshll.u32 %v186, 16
      %v271 = vrot.slane %v269, 5
      %v272 = vsel %vm234, %v267, %v271
      %v273 = vshrl.u32 %v186, 16
      %v275 = vrot.slane %v273, 4
      %v276 = vor.u32 %v275, %v271
      %v277 = vrot.slane %v276, 4
      %v279 = vshll.u32 %v217, 16
      %v281 = vrot.slane %v279, 5
      %v282 = vsel %vm234, %v277, %v281
      %v284 = vshrl.u32 %v187, 16
      %v286 = vrot.slane %v284, 4
      %v287 = vshll.u32 %v187, 16
      %v289 = vrot.slane %v287, 5
      %v290 = vor.u32 %v286, %v289
      %v291 = vrot.slane %v290, 4
      %v293 = vshll.u32 %v188, 16
      %v295 = vrot.slane %v293, 5
      %v296 = vsel %vm234, %v291, %v295
      %v297 = vshrl.u32 %v188, 16
      %v299 = vrot.slane %v297, 4
      %v300 = vor.u32 %v299, %v295
      %v301 = vrot.slane %v300, 4
      %v303 = vshll.u32 %v218, 16
      %v305 = vrot.slane %v303, 5
      %v306 = vsel %vm234, %v301, %v305
      %v308 = vshrl.u32 %v189, 16
      %v310 = vrot.slane %v308, 4
      %v311 = vshll.u32 %v189, 16
      %v313 = vrot.slane %v311, 5
      %v314 = vor.u32 %v310, %v313
      %v315 = vrot.slane %v314, 4
      %v317 = vshll.u32 %v190, 16
      %v319 = vrot.slane %v317, 5
      %v320 = vsel %vm234, %v315, %v319
      %v321 = vshrl.u32 %v190, 16
      %v323 = vrot.slane %v321, 4
      %v324 = vor.u32 %v323, %v319
      %v325 = vrot.slane %v324, 4
      %v327 = vshll.u32 %v219, 16
      %v329 = vrot.slane %v327, 5
      %v330 = vsel %vm234, %v325, %v329
      %v332 = vshrl.u32 %v191, 16
      %v334 = vrot.slane %v332, 4
      %v335 = vshll.u32 %v191, 16
      %v337 = vrot.slane %v335, 5
      %v338 = vor.u32 %v334, %v337
      %v339 = vrot.slane %v338, 4
      %v341 = vshll.u32 %v192, 16
      %v343 = vrot.slane %v341, 5
      %v344 = vsel %vm234, %v339, %v343
      %v345 = vshrl.u32 %v192, 16
      %v347 = vrot.slane %v345, 4
      %v348 = vor.u32 %v347, %v343
      %v349 = vrot.slane %v348, 4
      %v351 = vshll.u32 %v220, 16
      %v353 = vrot.slane %v351, 5
      %v354 = vsel %vm234, %v349, %v353
      %v356 = vshrl.u32 %v193, 16
      %v358 = vrot.slane %v356, 4
      %v359 = vshll.u32 %v193, 16
      %v361 = vrot.slane %v359, 5
      %v362 = vor.u32 %v358, %v361
      %v363 = vrot.slane %v362, 4
      %v365 = vshll.u32 %v194, 16
      %v367 = vrot.slane %v365, 5
      %v368 = vsel %vm234, %v363, %v367
      %v369 = vshrl.u32 %v194, 16
      %v371 = vrot.slane %v369, 4
      %v372 = vor.u32 %v371, %v367
      %v373 = vrot.slane %v372, 4
      %v375 = vshll.u32 %v221, 16
      %v377 = vrot.slane %v375, 5
      %v378 = vsel %vm234, %v373, %v377
      %v380 = vshrl.u32 %v195, 16
      %v382 = vrot.slane %v380, 4
      %v383 = vshll.u32 %v195, 16
      %v385 = vrot.slane %v383, 5
      %v386 = vor.u32 %v382, %v385
      %v387 = vrot.slane %v386, 4
      %v389 = vshll.u32 %v196, 16
      %v391 = vrot.slane %v389, 5
      %v392 = vsel %vm234, %v387, %v391
      %v393 = vshrl.u32 %v196, 16
      %v395 = vrot.slane %v393, 4
      %v396 = vor.u32 %v395, %v391
      %v397 = vrot.slane %v396, 4
      %v399 = vshll.u32 %v222, 16
      %v401 = vrot.slane %v399, 5
      %v402 = vsel %vm234, %v397, %v401
      %v404 = vshrl.u32 %v197, 16
      %v406 = vrot.slane %v404, 4
      %v407 = vshll.u32 %v197, 16
      %v409 = vrot.slane %v407, 5
      %v410 = vor.u32 %v406, %v409
      %v411 = vrot.slane %v410, 4
      %v413 = vshll.u32 %v198, 16
      %v415 = vrot.slane %v413, 5
      %v416 = vsel %vm234, %v411, %v415
      %v417 = vshrl.u32 %v198, 16
      %v419 = vrot.slane %v417, 4
      %v420 = vor.u32 %v419, %v415
      %v421 = vrot.slane %v420, 4
      %v423 = vshll.u32 %v223, 16
      %v425 = vrot.slane %v423, 5
      %v426 = vsel %vm234, %v421, %v425
      %v428 = vshrl.u32 %v199, 16
      %v430 = vrot.slane %v428, 4
      %v431 = vshll.u32 %v199, 16
      %v433 = vrot.slane %v431, 5
      %v434 = vor.u32 %v430, %v433
      %v435 = vrot.slane %v434, 4
      %v437 = vshll.u32 %v200, 16
      %v439 = vrot.slane %v437, 5
      %v440 = vsel %vm234, %v435, %v439
      %v441 = vshrl.u32 %v200, 16
      %v443 = vrot.slane %v441, 4
      %v444 = vor.u32 %v443, %v439
      %v445 = vrot.slane %v444, 4
      %v447 = vshll.u32 %v224, 16
      %v449 = vrot.slane %v447, 5
      %v450 = vsel %vm234, %v445, %v449
      %v452 = vshrl.u32 %v201, 16
      %v454 = vrot.slane %v452, 4
      %v455 = vshll.u32 %v201, 16
      %v457 = vrot.slane %v455, 5
      %v458 = vor.u32 %v454, %v457
      %v459 = vrot.slane %v458, 4
      %v461 = vshll.u32 %v202, 16
      %v463 = vrot.slane %v461, 5
      %v464 = vsel %vm234, %v459, %v463
      %v465 = vshrl.u32 %v202, 16
      %v467 = vrot.slane %v465, 4
      %v468 = vor.u32 %v467, %v463
      %v469 = vrot.slane %v468, 4
      %v471 = vshll.u32 %v225, 16
      %v473 = vrot.slane %v471, 5
      %v474 = vsel %vm234, %v469, %v473
      %v476 = vshrl.u32 %v203, 16
      %v478 = vrot.slane %v476, 4
      %v479 = vshll.u32 %v203, 16
      %v481 = vrot.slane %v479, 5
      %v482 = vor.u32 %v478, %v481
      %v483 = vrot.slane %v482, 4
      %v485 = vshll.u32 %v204, 16
      %v487 = vrot.slane %v485, 5
      %v488 = vsel %vm234, %v483, %v487
      %v489 = vshrl.u32 %v204, 16
      %v491 = vrot.slane %v489, 4
      %v492 = vor.u32 %v491, %v487
      %v493 = vrot.slane %v492, 4
      %v495 = vshll.u32 %v226, 16
      %v497 = vrot.slane %v495, 5
      %v498 = vsel %vm234, %v493, %v497
      %v500 = vshrl.u32 %v205, 16
      %v502 = vrot.slane %v500, 4
      %v503 = vshll.u32 %v205, 16
      %v505 = vrot.slane %v503, 5
      %v506 = vor.u32 %v502, %v505
      %v507 = vrot.slane %v506, 4
      %v509 = vshll.u32 %v206, 16
      %v511 = vrot.slane %v509, 5
      %v512 = vsel %vm234, %v507, %v511
      %v513 = vshrl.u32 %v206, 16
      %v515 = vrot.slane %v513, 4
      %v516 = vor.u32 %v515, %v511
      %v517 = vrot.slane %v516, 4
      %v519 = vshll.u32 %v227, 16
      %v521 = vrot.slane %v519, 5
      %v522 = vsel %vm234, %v517, %v521
      %v524 = vshrl.u32 %v207, 16
      %v526 = vrot.slane %v524, 4
      %v527 = vshll.u32 %v207, 16
      %v529 = vrot.slane %v527, 5
      %v530 = vor.u32 %v526, %v529
      %v531 = vrot.slane %v530, 4
      %v533 = vshll.u32 %v208, 16
      %v535 = vrot.slane %v533, 5
      %v536 = vsel %vm234, %v531, %v535
      %v537 = vshrl.u32 %v208, 16
      %v539 = vrot.slane %v537, 4
      %v540 = vor.u32 %v539, %v535
      %v541 = vrot.slane %v540, 4
      %v543 = vshll.u32 %v228, 16
      %v545 = vrot.slane %v543, 5
      %v546 = vsel %vm234, %v541, %v545
      %v548 = vshrl.u32 %v209, 16
      %v550 = vrot.slane %v548, 4
      %v551 = vshll.u32 %v209, 16
      %v553 = vrot.slane %v551, 5
      %v554 = vor.u32 %v550, %v553
      %v555 = vrot.slane %v554, 4
      %v557 = vshll.u32 %v210, 16
      %v559 = vrot.slane %v557, 5
      %v560 = vsel %vm234, %v555, %v559
      %v561 = vshrl.u32 %v210, 16
      %v563 = vrot.slane %v561, 4
      %v564 = vor.u32 %v563, %v559
      %v565 = vrot.slane %v564, 4
      %v567 = vshll.u32 %v229, 16
      %v569 = vrot.slane %v567, 5
      %v570 = vsel %vm234, %v565, %v569
      %v572 = vshrl.u32 %v211, 16
      %v574 = vrot.slane %v572, 4
      %v575 = vshll.u32 %v211, 16
      %v577 = vrot.slane %v575, 5
      %v578 = vor.u32 %v574, %v577
      %v579 = vrot.slane %v578, 4
      %v581 = vshll.u32 %v212, 16
      %v583 = vrot.slane %v581, 5
      %v584 = vsel %vm234, %v579, %v583
      %v585 = vshrl.u32 %v212, 16
      %v587 = vrot.slane %v585, 4
      %v588 = vor.u32 %v587, %v583
      %v589 = vrot.slane %v588, 4
      %v591 = vshll.u32 %v230, 16
      %v593 = vrot.slane %v591, 5
      %v594 = vsel %vm234, %v589, %v593
      %v596 = vshrl.u32 %v213, 16
      %v598 = vrot.slane %v596, 4
      %v599 = vshll.u32 %v213, 16
      %v601 = vrot.slane %v599, 5
      %v602 = vor.u32 %v598, %v601
      %v603 = vrot.slane %v602, 4
      %v605 = vshll.u32 %v214, 16
      %v607 = vrot.slane %v605, 5
      %v608 = vsel %vm234, %v603, %v607
      %v609 = vshrl.u32 %v214, 16
      %v611 = vrot.slane %v609, 4
      %v612 = vor.u32 %v611, %v607
      %v613 = vrot.slane %v612, 4
      %v615 = vshll.u32 %v231, 16
      %v617 = vrot.slane %v615, 5
      %v618 = vsel %vm234, %v613, %v617
      %s619 = scalar_lea.vmem %s1, 4
      %v620 = vld [vmem:[%s619] sm:$0xf]
      %v621 = vunpack.c.l.b16 %v248
      %v622 = vunpack.c.l.b16 %v258
      %v623 = vunpack.c.l.b16 %v272
      %v624 = vunpack.c.l.b16 %v282
      %v625 = vunpack.c.l.b16 %v296
      %v626 = vunpack.c.l.b16 %v306
      %v627 = vunpack.c.l.b16 %v320
      %v628 = vunpack.c.l.b16 %v330
      %v629 = vunpack.c.l.b16 %v344
      %v630 = vunpack.c.l.b16 %v354
      %v631 = vunpack.c.l.b16 %v368
      %v632 = vunpack.c.l.b16 %v378
      %v633 = vunpack.c.l.b16 %v392
      %v634 = vunpack.c.l.b16 %v402
      %v635 = vunpack.c.l.b16 %v416
      %v636 = vunpack.c.l.b16 %v426
      %v637 = vunpack.c.l.b16 %v440
      %v638 = vunpack.c.l.b16 %v450
      %v639 = vunpack.c.l.b16 %v464
      %v640 = vunpack.c.l.b16 %v474
      %v641 = vunpack.c.l.b16 %v488
      %v642 = vunpack.c.l.b16 %v498
      %v643 = vunpack.c.l.b16 %v512
      %v644 = vunpack.c.l.b16 %v522
      %v645 = vunpack.c.l.b16 %v536
      %v646 = vunpack.c.l.b16 %v546
      %v647 = vunpack.c.l.b16 %v560
      %v648 = vunpack.c.l.b16 %v570
      %v649 = vunpack.c.l.b16 %v584
      %v650 = vunpack.c.l.b16 %v594
      %v651 = vunpack.c.l.b16 %v608
      %v652 = vunpack.c.l.b16 %v618
      %v653 = vpack.c.b16 %v622, %v621
      %v654 = vpack.c.b16 %v624, %v623
      %v655 = vpack.c.b16 %v626, %v625
      %v656 = vpack.c.b16 %v628, %v627
      %v657 = vpack.c.b16 %v630, %v629
      %v658 = vpack.c.b16 %v632, %v631
      %v659 = vpack.c.b16 %v634, %v633
      %v660 = vpack.c.b16 %v636, %v635
      %v661 = vpack.c.b16 %v638, %v637
      %v662 = vpack.c.b16 %v640, %v639
      %v663 = vpack.c.b16 %v642, %v641
      %v664 = vpack.c.b16 %v644, %v643
      %v665 = vpack.c.b16 %v646, %v645
      %v666 = vpack.c.b16 %v648, %v647
      %v667 = vpack.c.b16 %v650, %v649
      %v668 = vpack.c.b16 %v652, %v651
      %vm669 = vcmask 31744
      %v671 = vsel %vm669, %v620, 0
      %v674 = vsel %vm669, %v653, 0
      %v677 = vsel %vm669, %v654, 0
      %v680 = vsel %vm669, %v655, 0
      %v683 = vsel %vm669, %v656, 0
      %v686 = vsel %vm669, %v657, 0
      %v689 = vsel %vm669, %v658, 0
      %v692 = vsel %vm669, %v659, 0
      %v695 = vsel %vm669, %v660, 0
      %v698 = vsel %vm669, %v661, 0
      %v701 = vsel %vm669, %v662, 0
      %v704 = vsel %vm669, %v663, 0
      %v707 = vsel %vm669, %v664, 0
      %v710 = vsel %vm669, %v665, 0
      %v713 = vsel %vm669, %v666, 0
      %v716 = vsel %vm669, %v667, 0
      %v719 = vsel %vm669, %v668, 0
      %721 = vmatprep.subr.bf16.mxu0 0
      %722 = vmatpush1.bf16.xpose.msra.mxu0 %v674
      %723 = vmatprep.subr.bf16.mxu0 0
      %724 = vmatpush1.bf16.xpose.msra.mxu0 %v677
      %725 = vmatprep.subr.bf16.mxu0 0
      %726 = vmatpush1.bf16.xpose.msra.mxu0 %v680
      %727 = vmatprep.subr.bf16.mxu0 0
      %728 = vmatpush1.bf16.xpose.msra.mxu0 %v683
      %729 = vmatprep.subr.bf16.mxu0 0
      %730 = vmatpush1.bf16.xpose.msra.mxu0 %v686
      %731 = vmatprep.subr.bf16.mxu0 0
      %732 = vmatpush1.bf16.xpose.msra.mxu0 %v689
      %733 = vmatprep.subr.bf16.mxu0 0
      %734 = vmatpush1.bf16.xpose.msra.mxu0 %v692
      %735 = vmatprep.subr.bf16.mxu0 0
      %736 = vmatpush1.bf16.xpose.msra.mxu0 %v695
      %737 = vmatprep.subr.bf16.mxu0 0
      %738 = vmatpush1.bf16.xpose.msra.mxu0 %v698
      %739 = vmatprep.subr.bf16.mxu0 0
      %740 = vmatpush1.bf16.xpose.msra.mxu0 %v701
      %741 = vmatprep.subr.bf16.mxu0 0
      %742 = vmatpush1.bf16.xpose.msra.mxu0 %v704
      %743 = vmatprep.subr.bf16.mxu0 0
      %744 = vmatpush1.bf16.xpose.msra.mxu0 %v707
      %745 = vmatprep.subr.bf16.mxu0 0
      %746 = vmatpush1.bf16.xpose.msra.mxu0 %v710
      %747 = vmatprep.subr.bf16.mxu0 0
      %748 = vmatpush1.bf16.xpose.msra.mxu0 %v713
      %749 = vmatprep.subr.bf16.mxu0 0
      %750 = vmatpush1.bf16.xpose.msra.mxu0 %v716
      %751 = vmatprep.subr.bf16.mxu0 0
      %752 = vmatpush1.bf16.xpose.msra.mxu0 %v719
      %753 = vmatprep.mubr.bf16.mxu0 0
      %754 = vmatmul.mubr.bf16.gmra.mrb[0].mxu0 %v671
      %v755 = vpop.f32.mrb[0].mxu0
      %v756 = vadd.f32 0.0, %v755
      %v757 = vpop.f32.mrb[0].mxu0
      %v758 = vadd.f32 0.0, %v757
      %v759 = vpop.f32.mrb[0].mxu0
      %v760 = vpop.f32.mrb[0].mxu0
      %761 = vdwg.mxu0
      %v794 = vunpack.c.l.b16 %v183
      %v795 = vunpack.c.l.b16 %v184
      %v796 = vunpack.c.l.b16 %v185
      %v797 = vunpack.c.l.b16 %v186
      %v798 = vunpack.c.l.b16 %v187
      %v799 = vunpack.c.l.b16 %v188
      %v800 = vunpack.c.l.b16 %v189
      %v801 = vunpack.c.l.b16 %v190
      %v802 = vunpack.c.l.b16 %v191
      %v803 = vunpack.c.l.b16 %v192
      %v804 = vunpack.c.l.b16 %v193
      %v805 = vunpack.c.l.b16 %v194
      %v806 = vunpack.c.l.b16 %v195
      %v807 = vunpack.c.l.b16 %v196
      %v808 = vunpack.c.l.b16 %v197
      %v809 = vunpack.c.l.b16 %v198
      %v810 = vunpack.c.l.b16 %v199
      %v811 = vunpack.c.l.b16 %v200
      %v812 = vunpack.c.l.b16 %v201
      %v813 = vunpack.c.l.b16 %v202
      %v814 = vunpack.c.l.b16 %v203
      %v815 = vunpack.c.l.b16 %v204
      %v816 = vunpack.c.l.b16 %v205
      %v817 = vunpack.c.l.b16 %v206
      %v818 = vunpack.c.l.b16 %v207
      %v819 = vunpack.c.l.b16 %v208
      %v820 = vunpack.c.l.b16 %v209
      %v821 = vunpack.c.l.b16 %v210
      %v822 = vunpack.c.l.b16 %v211
      %v823 = vunpack.c.l.b16 %v212
      %v824 = vunpack.c.l.b16 %v213
      %v825 = vunpack.c.l.b16 %v214
      %v826 = vpack.c.b16 %v795, %v794
      %v827 = vpack.c.b16 %v797, %v796
      %v828 = vpack.c.b16 %v799, %v798
      %v829 = vpack.c.b16 %v801, %v800
      %v830 = vpack.c.b16 %v803, %v802
      %v831 = vpack.c.b16 %v805, %v804
      %v832 = vpack.c.b16 %v807, %v806
      %v833 = vpack.c.b16 %v809, %v808
      %v834 = vpack.c.b16 %v811, %v810
      %v835 = vpack.c.b16 %v813, %v812
      %v836 = vpack.c.b16 %v815, %v814
      %v837 = vpack.c.b16 %v817, %v816
      %v838 = vpack.c.b16 %v819, %v818
      %v839 = vpack.c.b16 %v821, %v820
      %v840 = vpack.c.b16 %v823, %v822
      %v841 = vpack.c.b16 %v825, %v824
      %v843 = vsel %vm669, %v215, 0
      %v846 = vsel %vm669, %v826, 0
      %v849 = vsel %vm669, %v827, 0
      %v852 = vsel %vm669, %v828, 0
      %v855 = vsel %vm669, %v829, 0
      %v858 = vsel %vm669, %v830, 0
      %v861 = vsel %vm669, %v831, 0
      %v864 = vsel %vm669, %v832, 0
      %v867 = vsel %vm669, %v833, 0
      %v870 = vsel %vm669, %v834, 0
      %v873 = vsel %vm669, %v835, 0
      %v876 = vsel %vm669, %v836, 0
      %v879 = vsel %vm669, %v837, 0
      %v882 = vsel %vm669, %v838, 0
      %v885 = vsel %vm669, %v839, 0
      %v888 = vsel %vm669, %v840, 0
      %v891 = vsel %vm669, %v841, 0
      %893 = vmatprep.subr.bf16.mxu0 0
      %894 = vmatpush1.bf16.xpose.msra.mxu0 %v846
      %895 = vmatprep.subr.bf16.mxu0 0
      %896 = vmatpush1.bf16.xpose.msra.mxu0 %v849
      %897 = vmatprep.subr.bf16.mxu0 0
      %898 = vmatpush1.bf16.xpose.msra.mxu0 %v852
      %899 = vmatprep.subr.bf16.mxu0 0
      %900 = vmatpush1.bf16.xpose.msra.mxu0 %v855
      %901 = vmatprep.subr.bf16.mxu0 0
      %902 = vmatpush1.bf16.xpose.msra.mxu0 %v858
      %903 = vmatprep.subr.bf16.mxu0 0
      %904 = vmatpush1.bf16.xpose.msra.mxu0 %v861
      %905 = vmatprep.subr.bf16.mxu0 0
      %906 = vmatpush1.bf16.xpose.msra.mxu0 %v864
      %907 = vmatprep.subr.bf16.mxu0 0
      %908 = vmatpush1.bf16.xpose.msra.mxu0 %v867
      %909 = vmatprep.subr.bf16.mxu0 0
      %910 = vmatpush1.bf16.xpose.msra.mxu0 %v870
      %911 = vmatprep.subr.bf16.mxu0 0
      %912 = vmatpush1.bf16.xpose.msra.mxu0 %v873
      %913 = vmatprep.subr.bf16.mxu0 0
      %914 = vmatpush1.bf16.xpose.msra.mxu0 %v876
      %915 = vmatprep.subr.bf16.mxu0 0
      %916 = vmatpush1.bf16.xpose.msra.mxu0 %v879
      %917 = vmatprep.subr.bf16.mxu0 0
      %918 = vmatpush1.bf16.xpose.msra.mxu0 %v882
      %919 = vmatprep.subr.bf16.mxu0 0
      %920 = vmatpush1.bf16.xpose.msra.mxu0 %v885
      %921 = vmatprep.subr.bf16.mxu0 0
      %922 = vmatpush1.bf16.xpose.msra.mxu0 %v888
      %923 = vmatprep.subr.bf16.mxu0 0
      %924 = vmatpush1.bf16.xpose.msra.mxu0 %v891
      %925 = vmatprep.mubr.bf16.mxu0 0
      %926 = vmatmul.mubr.bf16.gmra.mrb[0].mxu0 %v843
      %v927 = vpop.f32.mrb[0].mxu0
      %v928 = vadd.f32 %v756, %v927
      %v929 = vpop.f32.mrb[0].mxu0
      %v930 = vadd.f32 %v758, %v929
      %v931 = vpop.f32.mrb[0].mxu0
      %v932 = vpop.f32.mrb[0].mxu0
      %933 = vdwg.mxu0
      %v934 = vld [vmem:[%s172] sm:$0xe]
      %v935 = vld [vmem:[%s172 + $0xc] sm:$0xe]
      %v936 = vld [vmem:[%s172 + $0x18] sm:$0xe]
      %v937 = vld [vmem:[%s172 + $0x24] sm:$0xe]
      %v938 = vld [vmem:[%s172 + $0x30] sm:$0xe]
      %v939 = vld [vmem:[%s172 + $0x3c] sm:$0xe]
      %v940 = vld [vmem:[%s172 + $0x48] sm:$0xe]
      %v941 = vld [vmem:[%s172 + $0x54] sm:$0xe]
      %v942 = vld [vmem:[%s172 + $0x60] sm:$0xe]
      %v943 = vld [vmem:[%s172 + $0x6c] sm:$0xe]
      %v944 = vld [vmem:[%s172 + $0x78] sm:$0xe]
      %v945 = vld [vmem:[%s172 + $0x84] sm:$0xe]
      %v946 = vld [vmem:[%s172 + $0x90] sm:$0xe]
      %v947 = vld [vmem:[%s172 + $0x9c] sm:$0xe]
      %v948 = vld [vmem:[%s172 + $0xa8] sm:$0xe]
      %v949 = vld [vmem:[%s172 + $0xb4] sm:$0xe]
      %vm982 = vcmask 1042432
      %vm983 = vcmask 1046532
      %vm984 = vmor %vm982, %vm983
      %v985 = vrot.slane %v934, 5
      %v986 = vrot.slane %v985, 4
      %v987 = vrot.slane %v184, 5
      %v988 = vsel %vm984, %v986, %v987
      %v989 = vrot.slane %v987, 4
      %v990 = vrot.slane %v216, 5
      %v991 = vsel %vm984, %v989, %v990
      %v992 = vrot.slane %v935, 5
      %v993 = vrot.slane %v992, 4
      %v994 = vrot.slane %v186, 5
      %v995 = vsel %vm984, %v993, %v994
      %v996 = vrot.slane %v994, 4
      %v997 = vrot.slane %v217, 5
      %v998 = vsel %vm984, %v996, %v997
      %v999 = vrot.slane %v936, 5
      %v1000 = vrot.slane %v999, 4
      %v1001 = vrot.slane %v188, 5
      %v1002 = vsel %vm984, %v1000, %v1001
      %v1003 = vrot.slane %v1001, 4
      %v1004 = vrot.slane %v218, 5
      %v1005 = vsel %vm984, %v1003, %v1004
      %v1006 = vrot.slane %v937, 5
      %v1007 = vrot.slane %v1006, 4
      %v1008 = vrot.slane %v190, 5
      %v1009 = vsel %vm984, %v1007, %v1008
      %v1010 = vrot.slane %v1008, 4
      %v1011 = vrot.slane %v219, 5
      %v1012 = vsel %vm984, %v1010, %v1011
      %v1013 = vrot.slane %v938, 5
      %v1014 = vrot.slane %v1013, 4
      %v1015 = vrot.slane %v192, 5
      %v1016 = vsel %vm984, %v1014, %v1015
      %v1017 = vrot.slane %v1015, 4
      %v1018 = vrot.slane %v220, 5
      %v1019 = vsel %vm984, %v1017, %v1018
      %v1020 = vrot.slane %v939, 5
      %v1021 = vrot.slane %v1020, 4
      %v1022 = vrot.slane %v194, 5
      %v1023 = vsel %vm984, %v1021, %v1022
      %v1024 = vrot.slane %v1022, 4
      %v1025 = vrot.slane %v221, 5
      %v1026 = vsel %vm984, %v1024, %v1025
      %v1027 = vrot.slane %v940, 5
      %v1028 = vrot.slane %v1027, 4
      %v1029 = vrot.slane %v196, 5
      %v1030 = vsel %vm984, %v1028, %v1029
      %v1031 = vrot.slane %v1029, 4
      %v1032 = vrot.slane %v222, 5
      %v1033 = vsel %vm984, %v1031, %v1032
      %v1034 = vrot.slane %v941, 5
      %v1035 = vrot.slane %v1034, 4
      %v1036 = vrot.slane %v198, 5
      %v1037 = vsel %vm984, %v1035, %v1036
      %v1038 = vrot.slane %v1036, 4
      %v1039 = vrot.slane %v223, 5
      %v1040 = vsel %vm984, %v1038, %v1039
      %v1041 = vrot.slane %v942, 5
      %v1042 = vrot.slane %v1041, 4
      %v1043 = vrot.slane %v200, 5
      %v1044 = vsel %vm984, %v1042, %v1043
      %v1045 = vrot.slane %v1043, 4
      %v1046 = vrot.slane %v224, 5
      %v1047 = vsel %vm984, %v1045, %v1046
      %v1048 = vrot.slane %v943, 5
      %v1049 = vrot.slane %v1048, 4
      %v1050 = vrot.slane %v202, 5
      %v1051 = vsel %vm984, %v1049, %v1050
      %v1052 = vrot.slane %v1050, 4
      %v1053 = vrot.slane %v225, 5
      %v1054 = vsel %vm984, %v1052, %v1053
      %v1055 = vrot.slane %v944, 5
      %v1056 = vrot.slane %v1055, 4
      %v1057 = vrot.slane %v204, 5
      %v1058 = vsel %vm984, %v1056, %v1057
      %v1059 = vrot.slane %v1057, 4
      %v1060 = vrot.slane %v226, 5
      %v1061 = vsel %vm984, %v1059, %v1060
      %v1062 = vrot.slane %v945, 5
      %v1063 = vrot.slane %v1062, 4
      %v1064 = vrot.slane %v206, 5
      %v1065 = vsel %vm984, %v1063, %v1064
      %v1066 = vrot.slane %v1064, 4
      %v1067 = vrot.slane %v227, 5
      %v1068 = vsel %vm984, %v1066, %v1067
      %v1069 = vrot.slane %v946, 5
      %v1070 = vrot.slane %v1069, 4
      %v1071 = vrot.slane %v208, 5
      %v1072 = vsel %vm984, %v1070, %v1071
      %v1073 = vrot.slane %v1071, 4
      %v1074 = vrot.slane %v228, 5
      %v1075 = vsel %vm984, %v1073, %v1074
      %v1076 = vrot.slane %v947, 5
      %v1077 = vrot.slane %v1076, 4
      %v1078 = vrot.slane %v210, 5
      %v1079 = vsel %vm984, %v1077, %v1078
      %v1080 = vrot.slane %v1078, 4
      %v1081 = vrot.slane %v229, 5
      %v1082 = vsel %vm984, %v1080, %v1081
      %v1083 = vrot.slane %v948, 5
      %v1084 = vrot.slane %v1083, 4
      %v1085 = vrot.slane %v212, 5
      %v1086 = vsel %vm984, %v1084, %v1085
      %v1087 = vrot.slane %v1085, 4
      %v1088 = vrot.slane %v230, 5
      %v1089 = vsel %vm984, %v1087, %v1088
      %v1090 = vrot.slane %v949, 5
      %v1091 = vrot.slane %v1090, 4
      %v1092 = vrot.slane %v214, 5
      %v1093 = vsel %vm984, %v1091, %v1092
      %v1094 = vrot.slane %v1092, 4
      %v1095 = vrot.slane %v231, 5
      %v1096 = vsel %vm984, %v1094, %v1095
      %s1097 = scalar_lea.vmem %s1, 8
      %v1098 = vld [vmem:[%s1097] sm:$0xf]
      %v1099 = vunpack.c.l.b16 %v988
      %v1100 = vunpack.c.l.b16 %v991
      %v1101 = vunpack.c.l.b16 %v995
      %v1102 = vunpack.c.l.b16 %v998
      %v1103 = vunpack.c.l.b16 %v1002
      %v1104 = vunpack.c.l.b16 %v1005
      %v1105 = vunpack.c.l.b16 %v1009
      %v1106 = vunpack.c.l.b16 %v1012
      %v1107 = vunpack.c.l.b16 %v1016
      %v1108 = vunpack.c.l.b16 %v1019
      %v1109 = vunpack.c.l.b16 %v1023
      %v1110 = vunpack.c.l.b16 %v1026
      %v1111 = vunpack.c.l.b16 %v1030
      %v1112 = vunpack.c.l.b16 %v1033
      %v1113 = vunpack.c.l.b16 %v1037
      %v1114 = vunpack.c.l.b16 %v1040
      %v1115 = vunpack.c.l.b16 %v1044
      %v1116 = vunpack.c.l.b16 %v1047
      %v1117 = vunpack.c.l.b16 %v1051
      %v1118 = vunpack.c.l.b16 %v1054
      %v1119 = vunpack.c.l.b16 %v1058
      %v1120 = vunpack.c.l.b16 %v1061
      %v1121 = vunpack.c.l.b16 %v1065
      %v1122 = vunpack.c.l.b16 %v1068
      %v1123 = vunpack.c.l.b16 %v1072
      %v1124 = vunpack.c.l.b16 %v1075
      %v1125 = vunpack.c.l.b16 %v1079
      %v1126 = vunpack.c.l.b16 %v1082
      %v1127 = vunpack.c.l.b16 %v1086
      %v1128 = vunpack.c.l.b16 %v1089
      %v1129 = vunpack.c.l.b16 %v1093
      %v1130 = vunpack.c.l.b16 %v1096
      %v1131 = vpack.c.b16 %v1100, %v1099
      %v1132 = vpack.c.b16 %v1102, %v1101
      %v1133 = vpack.c.b16 %v1104, %v1103
      %v1134 = vpack.c.b16 %v1106, %v1105
      %v1135 = vpack.c.b16 %v1108, %v1107
      %v1136 = vpack.c.b16 %v1110, %v1109
      %v1137 = vpack.c.b16 %v1112, %v1111
      %v1138 = vpack.c.b16 %v1114, %v1113
      %v1139 = vpack.c.b16 %v1116, %v1115
      %v1140 = vpack.c.b16 %v1118, %v1117
      %v1141 = vpack.c.b16 %v1120, %v1119
      %v1142 = vpack.c.b16 %v1122, %v1121
      %v1143 = vpack.c.b16 %v1124, %v1123
      %v1144 = vpack.c.b16 %v1126, %v1125
      %v1145 = vpack.c.b16 %v1128, %v1127
      %v1146 = vpack.c.b16 %v1130, %v1129
      %v1148 = vsel %vm669, %v1098, 0
      %v1151 = vsel %vm669, %v1131, 0
      %v1154 = vsel %vm669, %v1132, 0
      %v1157 = vsel %vm669, %v1133, 0
      %v1160 = vsel %vm669, %v1134, 0
      %v1163 = vsel %vm669, %v1135, 0
      %v1166 = vsel %vm669, %v1136, 0
      %v1169 = vsel %vm669, %v1137, 0
      %v1172 = vsel %vm669, %v1138, 0
      %v1175 = vsel %vm669, %v1139, 0
      %v1178 = vsel %vm669, %v1140, 0
      %v1181 = vsel %vm669, %v1141, 0
      %v1184 = vsel %vm669, %v1142, 0
      %v1187 = vsel %vm669, %v1143, 0
      %v1190 = vsel %vm669, %v1144, 0
      %v1193 = vsel %vm669, %v1145, 0
      %v1196 = vsel %vm669, %v1146, 0
      %1198 = vmatprep.subr.bf16.mxu0 0
      %1199 = vmatpush1.bf16.xpose.msra.mxu0 %v1151
      %1200 = vmatprep.subr.bf16.mxu0 0
      %1201 = vmatpush1.bf16.xpose.msra.mxu0 %v1154
      %1202 = vmatprep.subr.bf16.mxu0 0
      %1203 = vmatpush1.bf16.xpose.msra.mxu0 %v1157
      %1204 = vmatprep.subr.bf16.mxu0 0
      %1205 = vmatpush1.bf16.xpose.msra.mxu0 %v1160
      %1206 = vmatprep.subr.bf16.mxu0 0
      %1207 = vmatpush1.bf16.xpose.msra.mxu0 %v1163
      %1208 = vmatprep.subr.bf16.mxu0 0
      %1209 = vmatpush1.bf16.xpose.msra.mxu0 %v1166
      %1210 = vmatprep.subr.bf16.mxu0 0
      %1211 = vmatpush1.bf16.xpose.msra.mxu0 %v1169
      %1212 = vmatprep.subr.bf16.mxu0 0
      %1213 = vmatpush1.bf16.xpose.msra.mxu0 %v1172
      %1214 = vmatprep.subr.bf16.mxu0 0
      %1215 = vmatpush1.bf16.xpose.msra.mxu0 %v1175
      %1216 = vmatprep.subr.bf16.mxu0 0
      %1217 = vmatpush1.bf16.xpose.msra.mxu0 %v1178
      %1218 = vmatprep.subr.bf16.mxu0 0
      %1219 = vmatpush1.bf16.xpose.msra.mxu0 %v1181
      %1220 = vmatprep.subr.bf16.mxu0 0
      %1221 = vmatpush1.bf16.xpose.msra.mxu0 %v1184
      %1222 = vmatprep.subr.bf16.mxu0 0
      %1223 = vmatpush1.bf16.xpose.msra.mxu0 %v1187
      %1224 = vmatprep.subr.bf16.mxu0 0
      %1225 = vmatpush1.bf16.xpose.msra.mxu0 %v1190
      %1226 = vmatprep.subr.bf16.mxu0 0
      %1227 = vmatpush1.bf16.xpose.msra.mxu0 %v1193
      %1228 = vmatprep.subr.bf16.mxu0 0
      %1229 = vmatpush1.bf16.xpose.msra.mxu0 %v1196
      %1230 = vmatprep.mubr.bf16.mxu0 0
      %1231 = vmatmul.mubr.bf16.gmra.mrb[0].mxu0 %v1148
      %v1232 = vpop.f32.mrb[0].mxu0
      %v1233 = vadd.f32 0.0, %v1232
      %v1234 = vpop.f32.mrb[0].mxu0
      %v1235 = vadd.f32 0.0, %v1234
      %v1236 = vpop.f32.mrb[0].mxu0
      %v1237 = vpop.f32.mrb[0].mxu0
      %1238 = vdwg.mxu0
      %v1239 = vadd.f32 %v928, %v1233
      %v1240 = vadd.f32 %v930, %v1235
      %s1241 = scalar_lea.vmem %s172, 12
      %v1242 = vld [vmem:[%s1241] sm:$0xf]
      %v1243 = vld [vmem:[%s1241 + $0x4] sm:$0xf]
      %v1244 = vld [vmem:[%s1241 + $0xc] sm:$0xf]
      %v1245 = vld [vmem:[%s1241 + $0x10] sm:$0xf]
      %v1246 = vld [vmem:[%s1241 + $0x18] sm:$0xf]
      %v1247 = vld [vmem:[%s1241 + $0x1c] sm:$0xf]
      %v1248 = vld [vmem:[%s1241 + $0x24] sm:$0xf]
      %v1249 = vld [vmem:[%s1241 + $0x28] sm:$0xf]
      %v1250 = vld [vmem:[%s1241 + $0x30] sm:$0xf]
      %v1251 = vld [vmem:[%s1241 + $0x34] sm:$0xf]
      %v1252 = vld [vmem:[%s1241 + $0x3c] sm:$0xf]
      %v1253 = vld [vmem:[%s1241 + $0x40] sm:$0xf]
      %v1254 = vld [vmem:[%s1241 + $0x48] sm:$0xf]
      %v1255 = vld [vmem:[%s1241 + $0x4c] sm:$0xf]
      %v1256 = vld [vmem:[%s1241 + $0x54] sm:$0xf]
      %v1257 = vld [vmem:[%s1241 + $0x58] sm:$0xf]
      %v1258 = vld [vmem:[%s1241 + $0x60] sm:$0xf]
      %v1259 = vld [vmem:[%s1241 + $0x64] sm:$0xf]
      %v1260 = vld [vmem:[%s1241 + $0x6c] sm:$0xf]
      %v1261 = vld [vmem:[%s1241 + $0x70] sm:$0xf]
      %v1262 = vld [vmem:[%s1241 + $0x78] sm:$0xf]
      %v1263 = vld [vmem:[%s1241 + $0x7c] sm:$0xf]
      %v1264 = vld [vmem:[%s1241 + $0x84] sm:$0xf]
      %v1265 = vld [vmem:[%s1241 + $0x88] sm:$0xf]
      %v1266 = vld [vmem:[%s1241 + $0x90] sm:$0xf]
      %v1267 = vld [vmem:[%s1241 + $0x94] sm:$0xf]
      %v1268 = vld [vmem:[%s1241 + $0x9c] sm:$0xf]
      %v1269 = vld [vmem:[%s1241 + $0xa0] sm:$0xf]
      %v1270 = vld [vmem:[%s1241 + $0xa8] sm:$0xf]
      %v1271 = vld [vmem:[%s1241 + $0xac] sm:$0xf]
      %v1272 = vld [vmem:[%s1241 + $0xb4] sm:$0xf]
      %v1273 = vld [vmem:[%s1241 + $0xb8] sm:$0xf]
      %s1274 = scalar_lea.vmem %s1, 12
      %v1275 = vld [vmem:[%s1274] sm:$0xf]
      %v1308 = vunpack.c.l.b16 %v1242
      %v1309 = vunpack.c.l.b16 %v1243
      %v1310 = vunpack.c.l.b16 %v1244
      %v1311 = vunpack.c.l.b16 %v1245
      %v1312 = vunpack.c.l.b16 %v1246
      %v1313 = vunpack.c.l.b16 %v1247
      %v1314 = vunpack.c.l.b16 %v1248
      %v1315 = vunpack.c.l.b16 %v1249
      %v1316 = vunpack.c.l.b16 %v1250
      %v1317 = vunpack.c.l.b16 %v1251
      %v1318 = vunpack.c.l.b16 %v1252
      %v1319 = vunpack.c.l.b16 %v1253
      %v1320 = vunpack.c.l.b16 %v1254
      %v1321 = vunpack.c.l.b16 %v1255
      %v1322 = vunpack.c.l.b16 %v1256
      %v1323 = vunpack.c.l.b16 %v1257
      %v1324 = vunpack.c.l.b16 %v1258
      %v1325 = vunpack.c.l.b16 %v1259
      %v1326 = vunpack.c.l.b16 %v1260
      %v1327 = vunpack.c.l.b16 %v1261
      %v1328 = vunpack.c.l.b16 %v1262
      %v1329 = vunpack.c.l.b16 %v1263
      %v1330 = vunpack.c.l.b16 %v1264
      %v1331 = vunpack.c.l.b16 %v1265
      %v1332 = vunpack.c.l.b16 %v1266
      %v1333 = vunpack.c.l.b16 %v1267
      %v1334 = vunpack.c.l.b16 %v1268
      %v1335 = vunpack.c.l.b16 %v1269
      %v1336 = vunpack.c.l.b16 %v1270
      %v1337 = vunpack.c.l.b16 %v1271
      %v1338 = vunpack.c.l.b16 %v1272
      %v1339 = vunpack.c.l.b16 %v1273
      %v1340 = vpack.c.b16 %v1309, %v1308
      %v1341 = vpack.c.b16 %v1311, %v1310
      %v1342 = vpack.c.b16 %v1313, %v1312
      %v1343 = vpack.c.b16 %v1315, %v1314
      %v1344 = vpack.c.b16 %v1317, %v1316
      %v1345 = vpack.c.b16 %v1319, %v1318
      %v1346 = vpack.c.b16 %v1321, %v1320
      %v1347 = vpack.c.b16 %v1323, %v1322
      %v1348 = vpack.c.b16 %v1325, %v1324
      %v1349 = vpack.c.b16 %v1327, %v1326
      %v1350 = vpack.c.b16 %v1329, %v1328
      %v1351 = vpack.c.b16 %v1331, %v1330
      %v1352 = vpack.c.b16 %v1333, %v1332
      %v1353 = vpack.c.b16 %v1335, %v1334
      %v1354 = vpack.c.b16 %v1337, %v1336
      %v1355 = vpack.c.b16 %v1339, %v1338
      %v1357 = vsel %vm669, %v1275, 0
      %v1360 = vsel %vm669, %v1340, 0
      %v1363 = vsel %vm669, %v1341, 0
      %v1366 = vsel %vm669, %v1342, 0
      %v1369 = vsel %vm669, %v1343, 0
      %v1372 = vsel %vm669, %v1344, 0
      %v1375 = vsel %vm669, %v1345, 0
      %v1378 = vsel %vm669, %v1346, 0
      %v1381 = vsel %vm669, %v1347, 0
      %v1384 = vsel %vm669, %v1348, 0
      %v1387 = vsel %vm669, %v1349, 0
      %v1390 = vsel %vm669, %v1350, 0
      %v1393 = vsel %vm669, %v1351, 0
      %v1396 = vsel %vm669, %v1352, 0
      %v1399 = vsel %vm669, %v1353, 0
      %v1402 = vsel %vm669, %v1354, 0
      %v1405 = vsel %vm669, %v1355, 0
      %1407 = vmatprep.subr.bf16.mxu0 0
      %1408 = vmatpush1.bf16.xpose.msra.mxu0 %v1360
      %1409 = vmatprep.subr.bf16.mxu0 0
      %1410 = vmatpush1.bf16.xpose.msra.mxu0 %v1363
      %1411 = vmatprep.subr.bf16.mxu0 0
      %1412 = vmatpush1.bf16.xpose.msra.mxu0 %v1366
      %1413 = vmatprep.subr.bf16.mxu0 0
      %1414 = vmatpush1.bf16.xpose.msra.mxu0 %v1369
      %1415 = vmatprep.subr.bf16.mxu0 0
      %1416 = vmatpush1.bf16.xpose.msra.mxu0 %v1372
      %1417 = vmatprep.subr.bf16.mxu0 0
      %1418 = vmatpush1.bf16.xpose.msra.mxu0 %v1375
      %1419 = vmatprep.subr.bf16.mxu0 0
      %1420 = vmatpush1.bf16.xpose.msra.mxu0 %v1378
      %1421 = vmatprep.subr.bf16.mxu0 0
      %1422 = vmatpush1.bf16.xpose.msra.mxu0 %v1381
      %1423 = vmatprep.subr.bf16.mxu0 0
      %1424 = vmatpush1.bf16.xpose.msra.mxu0 %v1384
      %1425 = vmatprep.subr.bf16.mxu0 0
      %1426 = vmatpush1.bf16.xpose.msra.mxu0 %v1387
      %1427 = vmatprep.subr.bf16.mxu0 0
      %1428 = vmatpush1.bf16.xpose.msra.mxu0 %v1390
      %1429 = vmatprep.subr.bf16.mxu0 0
      %1430 = vmatpush1.bf16.xpose.msra.mxu0 %v1393
      %1431 = vmatprep.subr.bf16.mxu0 0
      %1432 = vmatpush1.bf16.xpose.msra.mxu0 %v1396
      %1433 = vmatprep.subr.bf16.mxu0 0
      %1434 = vmatpush1.bf16.xpose.msra.mxu0 %v1399
      %1435 = vmatprep.subr.bf16.mxu0 0
      %1436 = vmatpush1.bf16.xpose.msra.mxu0 %v1402
      %1437 = vmatprep.subr.bf16.mxu0 0
      %1438 = vmatpush1.bf16.xpose.msra.mxu0 %v1405
      %1439 = vmatprep.mubr.bf16.mxu0 0
      %1440 = vmatmul.mubr.bf16.gmra.mrb[0].mxu0 %v1357
      %v1441 = vpop.f32.mrb[0].mxu0
      %v1442 = vadd.f32 0.0, %v1441
      %v1443 = vpop.f32.mrb[0].mxu0
      %v1444 = vadd.f32 0.0, %v1443
      %v1445 = vpop.f32.mrb[0].mxu0
      %v1446 = vpop.f32.mrb[0].mxu0
      %1447 = vdwg.mxu0
      %v1448 = vadd.f32 %v1239, %v1442
      %v1449 = vadd.f32 %v1240, %v1444
      %v1450 = vld [vmem:[%s1241] sm:$0xf]
      %v1451 = vld [vmem:[%s1241 + $0x4] sm:$0xf]
      %v1452 = vld [vmem:[%s1241 + $0x8] sm:$0x1]
      %v1453 = vld [vmem:[%s1241 + $0xc] sm:$0xf]
      %v1454 = vld [vmem:[%s1241 + $0x10] sm:$0xf]
      %v1455 = vld [vmem:[%s1241 + $0x14] sm:$0x1]
      %v1456 = vld [vmem:[%s1241 + $0x18] sm:$0xf]
      %v1457 = vld [vmem:[%s1241 + $0x1c] sm:$0xf]
      %v1458 = vld [vmem:[%s1241 + $0x20] sm:$0x1]
      %v1459 = vld [vmem:[%s1241 + $0x24] sm:$0xf]
      %v1460 = vld [vmem:[%s1241 + $0x28] sm:$0xf]
      %v1461 = vld [vmem:[%s1241 + $0x2c] sm:$0x1]
      %v1462 = vld [vmem:[%s1241 + $0x30] sm:$0xf]
      %v1463 = vld [vmem:[%s1241 + $0x34] sm:$0xf]
      %v1464 = vld [vmem:[%s1241 + $0x38] sm:$0x1]
      %v1465 = vld [vmem:[%s1241 + $0x3c] sm:$0xf]
      %v1466 = vld [vmem:[%s1241 + $0x40] sm:$0xf]
      %v1467 = vld [vmem:[%s1241 + $0x44] sm:$0x1]
      %v1468 = vld [vmem:[%s1241 + $0x48] sm:$0xf]
      %v1469 = vld [vmem:[%s1241 + $0x4c] sm:$0xf]
      %v1470 = vld [vmem:[%s1241 + $0x50] sm:$0x1]
      %v1471 = vld [vmem:[%s1241 + $0x54] sm:$0xf]
      %v1472 = vld [vmem:[%s1241 + $0x58] sm:$0xf]
      %v1473 = vld [vmem:[%s1241 + $0x5c] sm:$0x1]
      %v1474 = vld [vmem:[%s1241 + $0x60] sm:$0xf]
      %v1475 = vld [vmem:[%s1241 + $0x64] sm:$0xf]
      %v1476 = vld [vmem:[%s1241 + $0x68] sm:$0x1]
      %v1477 = vld [vmem:[%s1241 + $0x6c] sm:$0xf]
      %v1478 = vld [vmem:[%s1241 + $0x70] sm:$0xf]
      %v1479 = vld [vmem:[%s1241 + $0x74] sm:$0x1]
      %v1480 = vld [vmem:[%s1241 + $0x78] sm:$0xf]
      %v1481 = vld [vmem:[%s1241 + $0x7c] sm:$0xf]
      %v1482 = vld [vmem:[%s1241 + $0x80] sm:$0x1]
      %v1483 = vld [vmem:[%s1241 + $0x84] sm:$0xf]
      %v1484 = vld [vmem:[%s1241 + $0x88] sm:$0xf]
      %v1485 = vld [vmem:[%s1241 + $0x8c] sm:$0x1]
      %v1486 = vld [vmem:[%s1241 + $0x90] sm:$0xf]
      %v1487 = vld [vmem:[%s1241 + $0x94] sm:$0xf]
      %v1488 = vld [vmem:[%s1241 + $0x98] sm:$0x1]
      %v1489 = vld [vmem:[%s1241 + $0x9c] sm:$0xf]
      %v1490 = vld [vmem:[%s1241 + $0xa0] sm:$0xf]
      %v1491 = vld [vmem:[%s1241 + $0xa4] sm:$0x1]
      %v1492 = vld [vmem:[%s1241 + $0xa8] sm:$0xf]
      %v1493 = vld [vmem:[%s1241 + $0xac] sm:$0xf]
      %v1494 = vld [vmem:[%s1241 + $0xb0] sm:$0x1]
      %v1495 = vld [vmem:[%s1241 + $0xb4] sm:$0xf]
      %v1496 = vld [vmem:[%s1241 + $0xb8] sm:$0xf]
      %v1497 = vld [vmem:[%s1241 + $0xbc] sm:$0x1]
      %v1499 = vshrl.u32 %v1450, 16
      %v1501 = vrot.slane %v1499, 4
      %v1502 = vshll.u32 %v1450, 16
      %v1504 = vrot.slane %v1502, 5
      %v1505 = vor.u32 %v1501, %v1504
      %v1506 = vrot.slane %v1505, 4
      %v1508 = vshll.u32 %v1451, 16
      %v1510 = vrot.slane %v1508, 5
      %v1511 = vsel %vm234, %v1506, %v1510
      %v1512 = vshrl.u32 %v1451, 16
      %v1514 = vrot.slane %v1512, 4
      %v1515 = vor.u32 %v1514, %v1510
      %v1516 = vrot.slane %v1515, 4
      %v1518 = vshll.u32 %v1452, 16
      %v1520 = vrot.slane %v1518, 5
      %v1521 = vsel %vm234, %v1516, %v1520
      %v1523 = vshrl.u32 %v1453, 16
      %v1525 = vrot.slane %v1523, 4
      %v1526 = vshll.u32 %v1453, 16
      %v1528 = vrot.slane %v1526, 5
      %v1529 = vor.u32 %v1525, %v1528
      %v1530 = vrot.slane %v1529, 4
      %v1532 = vshll.u32 %v1454, 16
      %v1534 = vrot.slane %v1532, 5
      %v1535 = vsel %vm234, %v1530, %v1534
      %v1536 = vshrl.u32 %v1454, 16
      %v1538 = vrot.slane %v1536, 4
      %v1539 = vor.u32 %v1538, %v1534
      %v1540 = vrot.slane %v1539, 4
      %v1542 = vshll.u32 %v1455, 16
      %v1544 = vrot.slane %v1542, 5
      %v1545 = vsel %vm234, %v1540, %v1544
      %v1547 = vshrl.u32 %v1456, 16
      %v1549 = vrot.slane %v1547, 4
      %v1550 = vshll.u32 %v1456, 16
      %v1552 = vrot.slane %v1550, 5
      %v1553 = vor.u32 %v1549, %v1552
      %v1554 = vrot.slane %v1553, 4
      %v1556 = vshll.u32 %v1457, 16
      %v1558 = vrot.slane %v1556, 5
      %v1559 = vsel %vm234, %v1554, %v1558
      %v1560 = vshrl.u32 %v1457, 16
      %v1562 = vrot.slane %v1560, 4
      %v1563 = vor.u32 %v1562, %v1558
      %v1564 = vrot.slane %v1563, 4
      %v1566 = vshll.u32 %v1458, 16
      %v1568 = vrot.slane %v1566, 5
      %v1569 = vsel %vm234, %v1564, %v1568
      %v1571 = vshrl.u32 %v1459, 16
      %v1573 = vrot.slane %v1571, 4
      %v1574 = vshll.u32 %v1459, 16
      %v1576 = vrot.slane %v1574, 5
      %v1577 = vor.u32 %v1573, %v1576
      %v1578 = vrot.slane %v1577, 4
      %v1580 = vshll.u32 %v1460, 16
      %v1582 = vrot.slane %v1580, 5
      %v1583 = vsel %vm234, %v1578, %v1582
      %v1584 = vshrl.u32 %v1460, 16
      %v1586 = vrot.slane %v1584, 4
      %v1587 = vor.u32 %v1586, %v1582
      %v1588 = vrot.slane %v1587, 4
      %v1590 = vshll.u32 %v1461, 16
      %v1592 = vrot.slane %v1590, 5
      %v1593 = vsel %vm234, %v1588, %v1592
      %v1595 = vshrl.u32 %v1462, 16
      %v1597 = vrot.slane %v1595, 4
      %v1598 = vshll.u32 %v1462, 16
      %v1600 = vrot.slane %v1598, 5
      %v1601 = vor.u32 %v1597, %v1600
      %v1602 = vrot.slane %v1601, 4
      %v1604 = vshll.u32 %v1463, 16
      %v1606 = vrot.slane %v1604, 5
      %v1607 = vsel %vm234, %v1602, %v1606
      %v1608 = vshrl.u32 %v1463, 16
      %v1610 = vrot.slane %v1608, 4
      %v1611 = vor.u32 %v1610, %v1606
      %v1612 = vrot.slane %v1611, 4
      %v1614 = vshll.u32 %v1464, 16
      %v1616 = vrot.slane %v1614, 5
      %v1617 = vsel %vm234, %v1612, %v1616
      %v1619 = vshrl.u32 %v1465, 16
      %v1621 = vrot.slane %v1619, 4
      %v1622 = vshll.u32 %v1465, 16
      %v1624 = vrot.slane %v1622, 5
      %v1625 = vor.u32 %v1621, %v1624
      %v1626 = vrot.slane %v1625, 4
      %v1628 = vshll.u32 %v1466, 16
      %v1630 = vrot.slane %v1628, 5
      %v1631 = vsel %vm234, %v1626, %v1630
      %v1632 = vshrl.u32 %v1466, 16
      %v1634 = vrot.slane %v1632, 4
      %v1635 = vor.u32 %v1634, %v1630
      %v1636 = vrot.slane %v1635, 4
      %v1638 = vshll.u32 %v1467, 16
      %v1640 = vrot.slane %v1638, 5
      %v1641 = vsel %vm234, %v1636, %v1640
      %v1643 = vshrl.u32 %v1468, 16
      %v1645 = vrot.slane %v1643, 4
      %v1646 = vshll.u32 %v1468, 16
      %v1648 = vrot.slane %v1646, 5
      %v1649 = vor.u32 %v1645, %v1648
      %v1650 = vrot.slane %v1649, 4
      %v1652 = vshll.u32 %v1469, 16
      %v1654 = vrot.slane %v1652, 5
      %v1655 = vsel %vm234, %v1650, %v1654
      %v1656 = vshrl.u32 %v1469, 16
      %v1658 = vrot.slane %v1656, 4
      %v1659 = vor.u32 %v1658, %v1654
      %v1660 = vrot.slane %v1659, 4
      %v1662 = vshll.u32 %v1470, 16
      %v1664 = vrot.slane %v1662, 5
      %v1665 = vsel %vm234, %v1660, %v1664
      %v1667 = vshrl.u32 %v1471, 16
      %v1669 = vrot.slane %v1667, 4
      %v1670 = vshll.u32 %v1471, 16
      %v1672 = vrot.slane %v1670, 5
      %v1673 = vor.u32 %v1669, %v1672
      %v1674 = vrot.slane %v1673, 4
      %v1676 = vshll.u32 %v1472, 16
      %v1678 = vrot.slane %v1676, 5
      %v1679 = vsel %vm234, %v1674, %v1678
      %v1680 = vshrl.u32 %v1472, 16
      %v1682 = vrot.slane %v1680, 4
      %v1683 = vor.u32 %v1682, %v1678
      %v1684 = vrot.slane %v1683, 4
      %v1686 = vshll.u32 %v1473, 16
      %v1688 = vrot.slane %v1686, 5
      %v1689 = vsel %vm234, %v1684, %v1688
      %v1691 = vshrl.u32 %v1474, 16
      %v1693 = vrot.slane %v1691, 4
      %v1694 = vshll.u32 %v1474, 16
      %v1696 = vrot.slane %v1694, 5
      %v1697 = vor.u32 %v1693, %v1696
      %v1698 = vrot.slane %v1697, 4
      %v1700 = vshll.u32 %v1475, 16
      %v1702 = vrot.slane %v1700, 5
      %v1703 = vsel %vm234, %v1698, %v1702
      %v1704 = vshrl.u32 %v1475, 16
      %v1706 = vrot.slane %v1704, 4
      %v1707 = vor.u32 %v1706, %v1702
      %v1708 = vrot.slane %v1707, 4
      %v1710 = vshll.u32 %v1476, 16
      %v1712 = vrot.slane %v1710, 5
      %v1713 = vsel %vm234, %v1708, %v1712
      %v1715 = vshrl.u32 %v1477, 16
      %v1717 = vrot.slane %v1715, 4
      %v1718 = vshll.u32 %v1477, 16
      %v1720 = vrot.slane %v1718, 5
      %v1721 = vor.u32 %v1717, %v1720
      %v1722 = vrot.slane %v1721, 4
      %v1724 = vshll.u32 %v1478, 16
      %v1726 = vrot.slane %v1724, 5
      %v1727 = vsel %vm234, %v1722, %v1726
      %v1728 = vshrl.u32 %v1478, 16
      %v1730 = vrot.slane %v1728, 4
      %v1731 = vor.u32 %v1730, %v1726
      %v1732 = vrot.slane %v1731, 4
      %v1734 = vshll.u32 %v1479, 16
      %v1736 = vrot.slane %v1734, 5
      %v1737 = vsel %vm234, %v1732, %v1736
      %v1739 = vshrl.u32 %v1480, 16
      %v1741 = vrot.slane %v1739, 4
      %v1742 = vshll.u32 %v1480, 16
      %v1744 = vrot.slane %v1742, 5
      %v1745 = vor.u32 %v1741, %v1744
      %v1746 = vrot.slane %v1745, 4
      %v1748 = vshll.u32 %v1481, 16
      %v1750 = vrot.slane %v1748, 5
      %v1751 = vsel %vm234, %v1746, %v1750
      %v1752 = vshrl.u32 %v1481, 16
      %v1754 = vrot.slane %v1752, 4
      %v1755 = vor.u32 %v1754, %v1750
      %v1756 = vrot.slane %v1755, 4
      %v1758 = vshll.u32 %v1482, 16
      %v1760 = vrot.slane %v1758, 5
      %v1761 = vsel %vm234, %v1756, %v1760
      %v1763 = vshrl.u32 %v1483, 16
      %v1765 = vrot.slane %v1763, 4
      %v1766 = vshll.u32 %v1483, 16
      %v1768 = vrot.slane %v1766, 5
      %v1769 = vor.u32 %v1765, %v1768
      %v1770 = vrot.slane %v1769, 4
      %v1772 = vshll.u32 %v1484, 16
      %v1774 = vrot.slane %v1772, 5
      %v1775 = vsel %vm234, %v1770, %v1774
      %v1776 = vshrl.u32 %v1484, 16
      %v1778 = vrot.slane %v1776, 4
      %v1779 = vor.u32 %v1778, %v1774
      %v1780 = vrot.slane %v1779, 4
      %v1782 = vshll.u32 %v1485, 16
      %v1784 = vrot.slane %v1782, 5
      %v1785 = vsel %vm234, %v1780, %v1784
      %v1787 = vshrl.u32 %v1486, 16
      %v1789 = vrot.slane %v1787, 4
      %v1790 = vshll.u32 %v1486, 16
      %v1792 = vrot.slane %v1790, 5
      %v1793 = vor.u32 %v1789, %v1792
      %v1794 = vrot.slane %v1793, 4
      %v1796 = vshll.u32 %v1487, 16
      %v1798 = vrot.slane %v1796, 5
      %v1799 = vsel %vm234, %v1794, %v1798
      %v1800 = vshrl.u32 %v1487, 16
      %v1802 = vrot.slane %v1800, 4
      %v1803 = vor.u32 %v1802, %v1798
      %v1804 = vrot.slane %v1803, 4
      %v1806 = vshll.u32 %v1488, 16
      %v1808 = vrot.slane %v1806, 5
      %v1809 = vsel %vm234, %v1804, %v1808
      %v1811 = vshrl.u32 %v1489, 16
      %v1813 = vrot.slane %v1811, 4
      %v1814 = vshll.u32 %v1489, 16
      %v1816 = vrot.slane %v1814, 5
      %v1817 = vor.u32 %v1813, %v1816
      %v1818 = vrot.slane %v1817, 4
      %v1820 = vshll.u32 %v1490, 16
      %v1822 = vrot.slane %v1820, 5
      %v1823 = vsel %vm234, %v1818, %v1822
      %v1824 = vshrl.u32 %v1490, 16
      %v1826 = vrot.slane %v1824, 4
      %v1827 = vor.u32 %v1826, %v1822
      %v1828 = vrot.slane %v1827, 4
      %v1830 = vshll.u32 %v1491, 16
      %v1832 = vrot.slane %v1830, 5
      %v1833 = vsel %vm234, %v1828, %v1832
      %v1835 = vshrl.u32 %v1492, 16
      %v1837 = vrot.slane %v1835, 4
      %v1838 = vshll.u32 %v1492, 16
      %v1840 = vrot.slane %v1838, 5
      %v1841 = vor.u32 %v1837, %v1840
      %v1842 = vrot.slane %v1841, 4
      %v1844 = vshll.u32 %v1493, 16
      %v1846 = vrot.slane %v1844, 5
      %v1847 = vsel %vm234, %v1842, %v1846
      %v1848 = vshrl.u32 %v1493, 16
      %v1850 = vrot.slane %v1848, 4
      %v1851 = vor.u32 %v1850, %v1846
      %v1852 = vrot.slane %v1851, 4
      %v1854 = vshll.u32 %v1494, 16
      %v1856 = vrot.slane %v1854, 5
      %v1857 = vsel %vm234, %v1852, %v1856
      %v1859 = vshrl.u32 %v1495, 16
      %v1861 = vrot.slane %v1859, 4
      %v1862 = vshll.u32 %v1495, 16
      %v1864 = vrot.slane %v1862, 5
      %v1865 = vor.u32 %v1861, %v1864
      %v1866 = vrot.slane %v1865, 4
      %v1868 = vshll.u32 %v1496, 16
      %v1870 = vrot.slane %v1868, 5
      %v1871 = vsel %vm234, %v1866, %v1870
      %v1872 = vshrl.u32 %v1496, 16
      %v1874 = vrot.slane %v1872, 4
      %v1875 = vor.u32 %v1874, %v1870
      %v1876 = vrot.slane %v1875, 4
      %v1878 = vshll.u32 %v1497, 16
      %v1880 = vrot.slane %v1878, 5
      %v1881 = vsel %vm234, %v1876, %v1880
      %s1882 = scalar_lea.vmem %s1, 16
      %v1883 = vld [vmem:[%s1882] sm:$0xf]
      %v1884 = vunpack.c.l.b16 %v1511
      %v1885 = vunpack.c.l.b16 %v1521
      %v1886 = vunpack.c.l.b16 %v1535
      %v1887 = vunpack.c.l.b16 %v1545
      %v1888 = vunpack.c.l.b16 %v1559
      %v1889 = vunpack.c.l.b16 %v1569
      %v1890 = vunpack.c.l.b16 %v1583
      %v1891 = vunpack.c.l.b16 %v1593
      %v1892 = vunpack.c.l.b16 %v1607
      %v1893 = vunpack.c.l.b16 %v1617
      %v1894 = vunpack.c.l.b16 %v1631
      %v1895 = vunpack.c.l.b16 %v1641
      %v1896 = vunpack.c.l.b16 %v1655
      %v1897 = vunpack.c.l.b16 %v1665
      %v1898 = vunpack.c.l.b16 %v1679
      %v1899 = vunpack.c.l.b16 %v1689
      %v1900 = vunpack.c.l.b16 %v1703
      %v1901 = vunpack.c.l.b16 %v1713
      %v1902 = vunpack.c.l.b16 %v1727
      %v1903 = vunpack.c.l.b16 %v1737
      %v1904 = vunpack.c.l.b16 %v1751
      %v1905 = vunpack.c.l.b16 %v1761
      %v1906 = vunpack.c.l.b16 %v1775
      %v1907 = vunpack.c.l.b16 %v1785
      %v1908 = vunpack.c.l.b16 %v1799
      %v1909 = vunpack.c.l.b16 %v1809
      %v1910 = vunpack.c.l.b16 %v1823
      %v1911 = vunpack.c.l.b16 %v1833
      %v1912 = vunpack.c.l.b16 %v1847
      %v1913 = vunpack.c.l.b16 %v1857
      %v1914 = vunpack.c.l.b16 %v1871
      %v1915 = vunpack.c.l.b16 %v1881
      %v1916 = vpack.c.b16 %v1885, %v1884
      %v1917 = vpack.c.b16 %v1887, %v1886
      %v1918 = vpack.c.b16 %v1889, %v1888
      %v1919 = vpack.c.b16 %v1891, %v1890
      %v1920 = vpack.c.b16 %v1893, %v1892
      %v1921 = vpack.c.b16 %v1895, %v1894
      %v1922 = vpack.c.b16 %v1897, %v1896
      %v1923 = vpack.c.b16 %v1899, %v1898
      %v1924 = vpack.c.b16 %v1901, %v1900
      %v1925 = vpack.c.b16 %v1903, %v1902
      %v1926 = vpack.c.b16 %v1905, %v1904
      %v1927 = vpack.c.b16 %v1907, %v1906
      %v1928 = vpack.c.b16 %v1909, %v1908
      %v1929 = vpack.c.b16 %v1911, %v1910
      %v1930 = vpack.c.b16 %v1913, %v1912
      %v1931 = vpack.c.b16 %v1915, %v1914
      %v1933 = vsel %vm669, %v1883, 0
      %v1936 = vsel %vm669, %v1916, 0
      %v1939 = vsel %vm669, %v1917, 0
      %v1942 = vsel %vm669, %v1918, 0
      %v1945 = vsel %vm669, %v1919, 0
      %v1948 = vsel %vm669, %v1920, 0
      %v1951 = vsel %vm669, %v1921, 0
      %v1954 = vsel %vm669, %v1922, 0
      %v1957 = vsel %vm669, %v1923, 0
      %v1960 = vsel %vm669, %v1924, 0
      %v1963 = vsel %vm669, %v1925, 0
      %v1966 = vsel %vm669, %v1926, 0
      %v1969 = vsel %vm669, %v1927, 0
      %v1972 = vsel %vm669, %v1928, 0
      %v1975 = vsel %vm669, %v1929, 0
      %v1978 = vsel %vm669, %v1930, 0
      %v1981 = vsel %vm669, %v1931, 0
      %1983 = vmatprep.subr.bf16.mxu0 0
      %1984 = vmatpush1.bf16.xpose.msra.mxu0 %v1936
      %1985 = vmatprep.subr.bf16.mxu0 0
      %1986 = vmatpush1.bf16.xpose.msra.mxu0 %v1939
      %1987 = vmatprep.subr.bf16.mxu0 0
      %1988 = vmatpush1.bf16.xpose.msra.mxu0 %v1942
      %1989 = vmatprep.subr.bf16.mxu0 0
      %1990 = vmatpush1.bf16.xpose.msra.mxu0 %v1945
      %1991 = vmatprep.subr.bf16.mxu0 0
      %1992 = vmatpush1.bf16.xpose.msra.mxu0 %v1948
      %1993 = vmatprep.subr.bf16.mxu0 0
      %1994 = vmatpush1.bf16.xpose.msra.mxu0 %v1951
      %1995 = vmatprep.subr.bf16.mxu0 0
      %1996 = vmatpush1.bf16.xpose.msra.mxu0 %v1954
      %1997 = vmatprep.subr.bf16.mxu0 0
      %1998 = vmatpush1.bf16.xpose.msra.mxu0 %v1957
      %1999 = vmatprep.subr.bf16.mxu0 0
      %2000 = vmatpush1.bf16.xpose.msra.mxu0 %v1960
      %2001 = vmatprep.subr.bf16.mxu0 0
      %2002 = vmatpush1.bf16.xpose.msra.mxu0 %v1963
      %2003 = vmatprep.subr.bf16.mxu0 0
      %2004 = vmatpush1.bf16.xpose.msra.mxu0 %v1966
      %2005 = vmatprep.subr.bf16.mxu0 0
      %2006 = vmatpush1.bf16.xpose.msra.mxu0 %v1969
      %2007 = vmatprep.subr.bf16.mxu0 0
      %2008 = vmatpush1.bf16.xpose.msra.mxu0 %v1972
      %2009 = vmatprep.subr.bf16.mxu0 0
      %2010 = vmatpush1.bf16.xpose.msra.mxu0 %v1975
      %2011 = vmatprep.subr.bf16.mxu0 0
      %2012 = vmatpush1.bf16.xpose.msra.mxu0 %v1978
      %2013 = vmatprep.subr.bf16.mxu0 0
      %2014 = vmatpush1.bf16.xpose.msra.mxu0 %v1981
      %2015 = vmatprep.mubr.bf16.mxu0 0
      %2016 = vmatmul.mubr.bf16.gmra.mrb[0].mxu0 %v1933
      %v2017 = vpop.f32.mrb[0].mxu0
      %v2018 = vadd.f32 0.0, %v2017
      %v2019 = vpop.f32.mrb[0].mxu0
      %v2020 = vadd.f32 0.0, %v2019
      %v2021 = vpop.f32.mrb[0].mxu0
      %v2022 = vpop.f32.mrb[0].mxu0
      %2023 = vdwg.mxu0
      %v2024 = vadd.f32 %v1448, %v2018
      %v2025 = vadd.f32 %v1449, %v2020
      %v2026 = vld [vmem:[%s1241] sm:$0xe]
      %v2027 = vld [vmem:[%s1241 + $0xc] sm:$0xe]
      %v2028 = vld [vmem:[%s1241 + $0x18] sm:$0xe]
      %v2029 = vld [vmem:[%s1241 + $0x24] sm:$0xe]
      %v2030 = vld [vmem:[%s1241 + $0x30] sm:$0xe]
      %v2031 = vld [vmem:[%s1241 + $0x3c] sm:$0xe]
      %v2032 = vld [vmem:[%s1241 + $0x48] sm:$0xe]
      %v2033 = vld [vmem:[%s1241 + $0x54] sm:$0xe]
      %v2034 = vld [vmem:[%s1241 + $0x60] sm:$0xe]
      %v2035 = vld [vmem:[%s1241 + $0x6c] sm:$0xe]
      %v2036 = vld [vmem:[%s1241 + $0x78] sm:$0xe]
      %v2037 = vld [vmem:[%s1241 + $0x84] sm:$0xe]
      %v2038 = vld [vmem:[%s1241 + $0x90] sm:$0xe]
      %v2039 = vld [vmem:[%s1241 + $0x9c] sm:$0xe]
      %v2040 = vld [vmem:[%s1241 + $0xa8] sm:$0xe]
      %v2041 = vld [vmem:[%s1241 + $0xb4] sm:$0xe]
      %v2090 = vrot.slane %v2026, 5
      %v2091 = vrot.slane %v2090, 4
      %v2092 = vrot.slane %v1451, 5
      %v2093 = vsel %vm984, %v2091, %v2092
      %v2094 = vrot.slane %v2092, 4
      %v2095 = vrot.slane %v1452, 5
      %v2096 = vsel %vm984, %v2094, %v2095
      %v2097 = vrot.slane %v2027, 5
      %v2098 = vrot.slane %v2097, 4
      %v2099 = vrot.slane %v1454, 5
      %v2100 = vsel %vm984, %v2098, %v2099
      %v2101 = vrot.slane %v2099, 4
      %v2102 = vrot.slane %v1455, 5
      %v2103 = vsel %vm984, %v2101, %v2102
      %v2104 = vrot.slane %v2028, 5
      %v2105 = vrot.slane %v2104, 4
      %v2106 = vrot.slane %v1457, 5
      %v2107 = vsel %vm984, %v2105, %v2106
      %v2108 = vrot.slane %v2106, 4
      %v2109 = vrot.slane %v1458, 5
      %v2110 = vsel %vm984, %v2108, %v2109
      %v2111 = vrot.slane %v2029, 5
      %v2112 = vrot.slane %v2111, 4
      %v2113 = vrot.slane %v1460, 5
      %v2114 = vsel %vm984, %v2112, %v2113
      %v2115 = vrot.slane %v2113, 4
      %v2116 = vrot.slane %v1461, 5
      %v2117 = vsel %vm984, %v2115, %v2116
      %v2118 = vrot.slane %v2030, 5
      %v2119 = vrot.slane %v2118, 4
      %v2120 = vrot.slane %v1463, 5
      %v2121 = vsel %vm984, %v2119, %v2120
      %v2122 = vrot.slane %v2120, 4
      %v2123 = vrot.slane %v1464, 5
      %v2124 = vsel %vm984, %v2122, %v2123
      %v2125 = vrot.slane %v2031, 5
      %v2126 = vrot.slane %v2125, 4
      %v2127 = vrot.slane %v1466, 5
      %v2128 = vsel %vm984, %v2126, %v2127
      %v2129 = vrot.slane %v2127, 4
      %v2130 = vrot.slane %v1467, 5
      %v2131 = vsel %vm984, %v2129, %v2130
      %v2132 = vrot.slane %v2032, 5
      %v2133 = vrot.slane %v2132, 4
      %v2134 = vrot.slane %v1469, 5
      %v2135 = vsel %vm984, %v2133, %v2134
      %v2136 = vrot.slane %v2134, 4
      %v2137 = vrot.slane %v1470, 5
      %v2138 = vsel %vm984, %v2136, %v2137
      %v2139 = vrot.slane %v2033, 5
      %v2140 = vrot.slane %v2139, 4
      %v2141 = vrot.slane %v1472, 5
      %v2142 = vsel %vm984, %v2140, %v2141
      %v2143 = vrot.slane %v2141, 4
      %v2144 = vrot.slane %v1473, 5
      %v2145 = vsel %vm984, %v2143, %v2144
      %v2146 = vrot.slane %v2034, 5
      %v2147 = vrot.slane %v2146, 4
      %v2148 = vrot.slane %v1475, 5
      %v2149 = vsel %vm984, %v2147, %v2148
      %v2150 = vrot.slane %v2148, 4
      %v2151 = vrot.slane %v1476, 5
      %v2152 = vsel %vm984, %v2150, %v2151
      %v2153 = vrot.slane %v2035, 5
      %v2154 = vrot.slane %v2153, 4
      %v2155 = vrot.slane %v1478, 5
      %v2156 = vsel %vm984, %v2154, %v2155
      %v2157 = vrot.slane %v2155, 4
      %v2158 = vrot.slane %v1479, 5
      %v2159 = vsel %vm984, %v2157, %v2158
      %v2160 = vrot.slane %v2036, 5
      %v2161 = vrot.slane %v2160, 4
      %v2162 = vrot.slane %v1481, 5
      %v2163 = vsel %vm984, %v2161, %v2162
      %v2164 = vrot.slane %v2162, 4
      %v2165 = vrot.slane %v1482, 5
      %v2166 = vsel %vm984, %v2164, %v2165
      %v2167 = vrot.slane %v2037, 5
      %v2168 = vrot.slane %v2167, 4
      %v2169 = vrot.slane %v1484, 5
      %v2170 = vsel %vm984, %v2168, %v2169
      %v2171 = vrot.slane %v2169, 4
      %v2172 = vrot.slane %v1485, 5
      %v2173 = vsel %vm984, %v2171, %v2172
      %v2174 = vrot.slane %v2038, 5
      %v2175 = vrot.slane %v2174, 4
      %v2176 = vrot.slane %v1487, 5
      %v2177 = vsel %vm984, %v2175, %v2176
      %v2178 = vrot.slane %v2176, 4
      %v2179 = vrot.slane %v1488, 5
      %v2180 = vsel %vm984, %v2178, %v2179
      %v2181 = vrot.slane %v2039, 5
      %v2182 = vrot.slane %v2181, 4
      %v2183 = vrot.slane %v1490, 5
      %v2184 = vsel %vm984, %v2182, %v2183
      %v2185 = vrot.slane %v2183, 4
      %v2186 = vrot.slane %v1491, 5
      %v2187 = vsel %vm984, %v2185, %v2186
      %v2188 = vrot.slane %v2040, 5
      %v2189 = vrot.slane %v2188, 4
      %v2190 = vrot.slane %v1493, 5
      %v2191 = vsel %vm984, %v2189, %v2190
      %v2192 = vrot.slane %v2190, 4
      %v2193 = vrot.slane %v1494, 5
      %v2194 = vsel %vm984, %v2192, %v2193
      %v2195 = vrot.slane %v2041, 5
      %v2196 = vrot.slane %v2195, 4
      %v2197 = vrot.slane %v1496, 5
      %v2198 = vsel %vm984, %v2196, %v2197
      %v2199 = vrot.slane %v2197, 4
      %v2200 = vrot.slane %v1497, 5
      %v2201 = vsel %vm984, %v2199, %v2200
      %s2202 = scalar_lea.vmem %s1, 20
      %v2203 = vld [vmem:[%s2202] sm:$0xf]
      %v2204 = vunpack.c.l.b16 %v2093
      %v2205 = vunpack.c.l.b16 %v2096
      %v2206 = vunpack.c.l.b16 %v2100
      %v2207 = vunpack.c.l.b16 %v2103
      %v2208 = vunpack.c.l.b16 %v2107
      %v2209 = vunpack.c.l.b16 %v2110
      %v2210 = vunpack.c.l.b16 %v2114
      %v2211 = vunpack.c.l.b16 %v2117
      %v2212 = vunpack.c.l.b16 %v2121
      %v2213 = vunpack.c.l.b16 %v2124
      %v2214 = vunpack.c.l.b16 %v2128
      %v2215 = vunpack.c.l.b16 %v2131
      %v2216 = vunpack.c.l.b16 %v2135
      %v2217 = vunpack.c.l.b16 %v2138
      %v2218 = vunpack.c.l.b16 %v2142
      %v2219 = vunpack.c.l.b16 %v2145
      %v2220 = vunpack.c.l.b16 %v2149
      %v2221 = vunpack.c.l.b16 %v2152
      %v2222 = vunpack.c.l.b16 %v2156
      %v2223 = vunpack.c.l.b16 %v2159
      %v2224 = vunpack.c.l.b16 %v2163
      %v2225 = vunpack.c.l.b16 %v2166
      %v2226 = vunpack.c.l.b16 %v2170
      %v2227 = vunpack.c.l.b16 %v2173
      %v2228 = vunpack.c.l.b16 %v2177
      %v2229 = vunpack.c.l.b16 %v2180
      %v2230 = vunpack.c.l.b16 %v2184
      %v2231 = vunpack.c.l.b16 %v2187
      %v2232 = vunpack.c.l.b16 %v2191
      %v2233 = vunpack.c.l.b16 %v2194
      %v2234 = vunpack.c.l.b16 %v2198
      %v2235 = vunpack.c.l.b16 %v2201
      %v2236 = vpack.c.b16 %v2205, %v2204
      %v2237 = vpack.c.b16 %v2207, %v2206
      %v2238 = vpack.c.b16 %v2209, %v2208
      %v2239 = vpack.c.b16 %v2211, %v2210
      %v2240 = vpack.c.b16 %v2213, %v2212
      %v2241 = vpack.c.b16 %v2215, %v2214
      %v2242 = vpack.c.b16 %v2217, %v2216
      %v2243 = vpack.c.b16 %v2219, %v2218
      %v2244 = vpack.c.b16 %v2221, %v2220
      %v2245 = vpack.c.b16 %v2223, %v2222
      %v2246 = vpack.c.b16 %v2225, %v2224
      %v2247 = vpack.c.b16 %v2227, %v2226
      %v2248 = vpack.c.b16 %v2229, %v2228
      %v2249 = vpack.c.b16 %v2231, %v2230
      %v2250 = vpack.c.b16 %v2233, %v2232
      %v2251 = vpack.c.b16 %v2235, %v2234
      %v2253 = vsel %vm669, %v2203, 0
      %v2256 = vsel %vm669, %v2236, 0
      %v2259 = vsel %vm669, %v2237, 0
      %v2262 = vsel %vm669, %v2238, 0
      %v2265 = vsel %vm669, %v2239, 0
      %v2268 = vsel %vm669, %v2240, 0
      %v2271 = vsel %vm669, %v2241, 0
      %v2274 = vsel %vm669, %v2242, 0
      %v2277 = vsel %vm669, %v2243, 0
      %v2280 = vsel %vm669, %v2244, 0
      %v2283 = vsel %vm669, %v2245, 0
      %v2286 = vsel %vm669, %v2246, 0
      %v2289 = vsel %vm669, %v2247, 0
      %v2292 = vsel %vm669, %v2248, 0
      %v2295 = vsel %vm669, %v2249, 0
      %v2298 = vsel %vm669, %v2250, 0
      %v2301 = vsel %vm669, %v2251, 0
      %2303 = vmatprep.subr.bf16.mxu0 0
      %2304 = vmatpush1.bf16.xpose.msra.mxu0 %v2256
      %2305 = vmatprep.subr.bf16.mxu0 0
      %2306 = vmatpush1.bf16.xpose.msra.mxu0 %v2259
      %2307 = vmatprep.subr.bf16.mxu0 0
      %2308 = vmatpush1.bf16.xpose.msra.mxu0 %v2262
      %2309 = vmatprep.subr.bf16.mxu0 0
      %2310 = vmatpush1.bf16.xpose.msra.mxu0 %v2265
      %2311 = vmatprep.subr.bf16.mxu0 0
      %2312 = vmatpush1.bf16.xpose.msra.mxu0 %v2268
      %2313 = vmatprep.subr.bf16.mxu0 0
      %2314 = vmatpush1.bf16.xpose.msra.mxu0 %v2271
      %2315 = vmatprep.subr.bf16.mxu0 0
      %2316 = vmatpush1.bf16.xpose.msra.mxu0 %v2274
      %2317 = vmatprep.subr.bf16.mxu0 0
      %2318 = vmatpush1.bf16.xpose.msra.mxu0 %v2277
      %2319 = vmatprep.subr.bf16.mxu0 0
      %2320 = vmatpush1.bf16.xpose.msra.mxu0 %v2280
      %2321 = vmatprep.subr.bf16.mxu0 0
      %2322 = vmatpush1.bf16.xpose.msra.mxu0 %v2283
      %2323 = vmatprep.subr.bf16.mxu0 0
      %2324 = vmatpush1.bf16.xpose.msra.mxu0 %v2286
      %2325 = vmatprep.subr.bf16.mxu0 0
      %2326 = vmatpush1.bf16.xpose.msra.mxu0 %v2289
      %2327 = vmatprep.subr.bf16.mxu0 0
      %2328 = vmatpush1.bf16.xpose.msra.mxu0 %v2292
      %2329 = vmatprep.subr.bf16.mxu0 0
      %2330 = vmatpush1.bf16.xpose.msra.mxu0 %v2295
      %2331 = vmatprep.subr.bf16.mxu0 0
      %2332 = vmatpush1.bf16.xpose.msra.mxu0 %v2298
      %2333 = vmatprep.subr.bf16.mxu0 0
      %2334 = vmatpush1.bf16.xpose.msra.mxu0 %v2301
      %2335 = vmatprep.mubr.bf16.mxu0 0
      %2336 = vmatmul.mubr.bf16.gmra.mrb[0].mxu0 %v2253
      %v2337 = vpop.f32.mrb[0].mxu0
      %v2338 = vadd.f32 0.0, %v2337
      %v2339 = vpop.f32.mrb[0].mxu0
      %v2340 = vadd.f32 0.0, %v2339
      %v2341 = vpop.f32.mrb[0].mxu0
      %v2342 = vpop.f32.mrb[0].mxu0
      %2343 = vdwg.mxu0
      %v2344 = vadd.f32 %v2024, %v2338
      %v2345 = vadd.f32 %v2025, %v2340
      %s2346 = scalar_lea.vmem %s172, 24
      %v2347 = vld [vmem:[%s2346] sm:$0xf]
      %v2348 = vld [vmem:[%s2346 + $0x4] sm:$0xf]
      %v2349 = vld [vmem:[%s2346 + $0xc] sm:$0xf]
      %v2350 = vld [vmem:[%s2346 + $0x10] sm:$0xf]
      %v2351 = vld [vmem:[%s2346 + $0x18] sm:$0xf]
      %v2352 = vld [vmem:[%s2346 + $0x1c] sm:$0xf]
      %v2353 = vld [vmem:[%s2346 + $0x24] sm:$0xf]
      %v2354 = vld [vmem:[%s2346 + $0x28] sm:$0xf]
      %v2355 = vld [vmem:[%s2346 + $0x30] sm:$0xf]
      %v2356 = vld [vmem:[%s2346 + $0x34] sm:$0xf]
      %v2357 = vld [vmem:[%s2346 + $0x3c] sm:$0xf]
      %v2358 = vld [vmem:[%s2346 + $0x40] sm:$0xf]
      %v2359 = vld [vmem:[%s2346 + $0x48] sm:$0xf]
      %v2360 = vld [vmem:[%s2346 + $0x4c] sm:$0xf]
      %v2361 = vld [vmem:[%s2346 + $0x54] sm:$0xf]
      %v2362 = vld [vmem:[%s2346 + $0x58] sm:$0xf]
      %v2363 = vld [vmem:[%s2346 + $0x60] sm:$0xf]
      %v2364 = vld [vmem:[%s2346 + $0x64] sm:$0xf]
      %v2365 = vld [vmem:[%s2346 + $0x6c] sm:$0xf]
      %v2366 = vld [vmem:[%s2346 + $0x70] sm:$0xf]
      %v2367 = vld [vmem:[%s2346 + $0x78] sm:$0xf]
      %v2368 = vld [vmem:[%s2346 + $0x7c] sm:$0xf]
      %v2369 = vld [vmem:[%s2346 + $0x84] sm:$0xf]
      %v2370 = vld [vmem:[%s2346 + $0x88] sm:$0xf]
      %v2371 = vld [vmem:[%s2346 + $0x90] sm:$0xf]
      %v2372 = vld [vmem:[%s2346 + $0x94] sm:$0xf]
      %v2373 = vld [vmem:[%s2346 + $0x9c] sm:$0xf]
      %v2374 = vld [vmem:[%s2346 + $0xa0] sm:$0xf]
      %v2375 = vld [vmem:[%s2346 + $0xa8] sm:$0xf]
      %v2376 = vld [vmem:[%s2346 + $0xac] sm:$0xf]
      %v2377 = vld [vmem:[%s2346 + $0xb4] sm:$0xf]
      %v2378 = vld [vmem:[%s2346 + $0xb8] sm:$0xf]
      %s2379 = scalar_lea.vmem %s1, 24
      %v2380 = vld [vmem:[%s2379] sm:$0xf]
      %v2413 = vunpack.c.l.b16 %v2347
      %v2414 = vunpack.c.l.b16 %v2348
      %v2415 = vunpack.c.l.b16 %v2349
      %v2416 = vunpack.c.l.b16 %v2350
      %v2417 = vunpack.c.l.b16 %v2351
      %v2418 = vunpack.c.l.b16 %v2352
      %v2419 = vunpack.c.l.b16 %v2353
      %v2420 = vunpack.c.l.b16 %v2354
      %v2421 = vunpack.c.l.b16 %v2355
      %v2422 = vunpack.c.l.b16 %v2356
      %v2423 = vunpack.c.l.b16 %v2357
      %v2424 = vunpack.c.l.b16 %v2358
      %v2425 = vunpack.c.l.b16 %v2359
      %v2426 = vunpack.c.l.b16 %v2360
      %v2427 = vunpack.c.l.b16 %v2361
      %v2428 = vunpack.c.l.b16 %v2362
      %v2429 = vunpack.c.l.b16 %v2363
      %v2430 = vunpack.c.l.b16 %v2364
      %v2431 = vunpack.c.l.b16 %v2365
      %v2432 = vunpack.c.l.b16 %v2366
      %v2433 = vunpack.c.l.b16 %v2367
      %v2434 = vunpack.c.l.b16 %v2368
      %v2435 = vunpack.c.l.b16 %v2369
      %v2436 = vunpack.c.l.b16 %v2370
      %v2437 = vunpack.c.l.b16 %v2371
      %v2438 = vunpack.c.l.b16 %v2372
      %v2439 = vunpack.c.l.b16 %v2373
      %v2440 = vunpack.c.l.b16 %v2374
      %v2441 = vunpack.c.l.b16 %v2375
      %v2442 = vunpack.c.l.b16 %v2376
      %v2443 = vunpack.c.l.b16 %v2377
      %v2444 = vunpack.c.l.b16 %v2378
      %v2445 = vpack.c.b16 %v2414, %v2413
      %v2446 = vpack.c.b16 %v2416, %v2415
      %v2447 = vpack.c.b16 %v2418, %v2417
      %v2448 = vpack.c.b16 %v2420, %v2419
      %v2449 = vpack.c.b16 %v2422, %v2421
      %v2450 = vpack.c.b16 %v2424, %v2423
      %v2451 = vpack.c.b16 %v2426, %v2425
      %v2452 = vpack.c.b16 %v2428, %v2427
      %v2453 = vpack.c.b16 %v2430, %v2429
      %v2454 = vpack.c.b16 %v2432, %v2431
      %v2455 = vpack.c.b16 %v2434, %v2433
      %v2456 = vpack.c.b16 %v2436, %v2435
      %v2457 = vpack.c.b16 %v2438, %v2437
      %v2458 = vpack.c.b16 %v2440, %v2439
      %v2459 = vpack.c.b16 %v2442, %v2441
      %v2460 = vpack.c.b16 %v2444, %v2443
      %v2462 = vsel %vm669, %v2380, 0
      %v2465 = vsel %vm669, %v2445, 0
      %v2468 = vsel %vm669, %v2446, 0
      %v2471 = vsel %vm669, %v2447, 0
      %v2474 = vsel %vm669, %v2448, 0
      %v2477 = vsel %vm669, %v2449, 0
      %v2480 = vsel %vm669, %v2450, 0
      %v2483 = vsel %vm669, %v2451, 0
      %v2486 = vsel %vm669, %v2452, 0
      %v2489 = vsel %vm669, %v2453, 0
      %v2492 = vsel %vm669, %v2454, 0
      %v2495 = vsel %vm669, %v2455, 0
      %v2498 = vsel %vm669, %v2456, 0
      %v2501 = vsel %vm669, %v2457, 0
      %v2504 = vsel %vm669, %v2458, 0
      %v2507 = vsel %vm669, %v2459, 0
      %v2510 = vsel %vm669, %v2460, 0
      %2512 = vmatprep.subr.bf16.mxu0 0
      %2513 = vmatpush1.bf16.xpose.msra.mxu0 %v2465
      %2514 = vmatprep.subr.bf16.mxu0 0
      %2515 = vmatpush1.bf16.xpose.msra.mxu0 %v2468
      %2516 = vmatprep.subr.bf16.mxu0 0
      %2517 = vmatpush1.bf16.xpose.msra.mxu0 %v2471
      %2518 = vmatprep.subr.bf16.mxu0 0
      %2519 = vmatpush1.bf16.xpose.msra.mxu0 %v2474
      %2520 = vmatprep.subr.bf16.mxu0 0
      %2521 = vmatpush1.bf16.xpose.msra.mxu0 %v2477
      %2522 = vmatprep.subr.bf16.mxu0 0
      %2523 = vmatpush1.bf16.xpose.msra.mxu0 %v2480
      %2524 = vmatprep.subr.bf16.mxu0 0
      %2525 = vmatpush1.bf16.xpose.msra.mxu0 %v2483
      %2526 = vmatprep.subr.bf16.mxu0 0
      %2527 = vmatpush1.bf16.xpose.msra.mxu0 %v2486
      %2528 = vmatprep.subr.bf16.mxu0 0
      %2529 = vmatpush1.bf16.xpose.msra.mxu0 %v2489
      %2530 = vmatprep.subr.bf16.mxu0 0
      %2531 = vmatpush1.bf16.xpose.msra.mxu0 %v2492
      %2532 = vmatprep.subr.bf16.mxu0 0
      %2533 = vmatpush1.bf16.xpose.msra.mxu0 %v2495
      %2534 = vmatprep.subr.bf16.mxu0 0
      %2535 = vmatpush1.bf16.xpose.msra.mxu0 %v2498
      %2536 = vmatprep.subr.bf16.mxu0 0
      %2537 = vmatpush1.bf16.xpose.msra.mxu0 %v2501
      %2538 = vmatprep.subr.bf16.mxu0 0
      %2539 = vmatpush1.bf16.xpose.msra.mxu0 %v2504
      %2540 = vmatprep.subr.bf16.mxu0 0
      %2541 = vmatpush1.bf16.xpose.msra.mxu0 %v2507
      %2542 = vmatprep.subr.bf16.mxu0 0
      %2543 = vmatpush1.bf16.xpose.msra.mxu0 %v2510
      %2544 = vmatprep.mubr.bf16.mxu0 0
      %2545 = vmatmul.mubr.bf16.gmra.mrb[0].mxu0 %v2462
      %v2546 = vpop.f32.mrb[0].mxu0
      %v2547 = vadd.f32 0.0, %v2546
      %v2548 = vpop.f32.mrb[0].mxu0
      %v2549 = vadd.f32 0.0, %v2548
      %v2550 = vpop.f32.mrb[0].mxu0
      %v2551 = vpop.f32.mrb[0].mxu0
      %2552 = vdwg.mxu0
      %v2553 = vadd.f32 %v2344, %v2547
      %v2554 = vadd.f32 %v2345, %v2549
      %v2555 = vld [vmem:[%s2346] sm:$0xf]
      %v2556 = vld [vmem:[%s2346 + $0x4] sm:$0xf]
      %v2557 = vld [vmem:[%s2346 + $0x8] sm:$0x1]
      %v2558 = vld [vmem:[%s2346 + $0xc] sm:$0xf]
      %v2559 = vld [vmem:[%s2346 + $0x10] sm:$0xf]
      %v2560 = vld [vmem:[%s2346 + $0x14] sm:$0x1]
      %v2561 = vld [vmem:[%s2346 + $0x18] sm:$0xf]
      %v2562 = vld [vmem:[%s2346 + $0x1c] sm:$0xf]
      %v2563 = vld [vmem:[%s2346 + $0x20] sm:$0x1]
      %v2564 = vld [vmem:[%s2346 + $0x24] sm:$0xf]
      %v2565 = vld [vmem:[%s2346 + $0x28] sm:$0xf]
      %v2566 = vld [vmem:[%s2346 + $0x2c] sm:$0x1]
      %v2567 = vld [vmem:[%s2346 + $0x30] sm:$0xf]
      %v2568 = vld [vmem:[%s2346 + $0x34] sm:$0xf]
      %v2569 = vld [vmem:[%s2346 + $0x38] sm:$0x1]
      %v2570 = vld [vmem:[%s2346 + $0x3c] sm:$0xf]
      %v2571 = vld [vmem:[%s2346 + $0x40] sm:$0xf]
      %v2572 = vld [vmem:[%s2346 + $0x44] sm:$0x1]
      %v2573 = vld [vmem:[%s2346 + $0x48] sm:$0xf]
      %v2574 = vld [vmem:[%s2346 + $0x4c] sm:$0xf]
      %v2575 = vld [vmem:[%s2346 + $0x50] sm:$0x1]
      %v2576 = vld [vmem:[%s2346 + $0x54] sm:$0xf]
      %v2577 = vld [vmem:[%s2346 + $0x58] sm:$0xf]
      %v2578 = vld [vmem:[%s2346 + $0x5c] sm:$0x1]
      %v2579 = vld [vmem:[%s2346 + $0x60] sm:$0xf]
      %v2580 = vld [vmem:[%s2346 + $0x64] sm:$0xf]
      %v2581 = vld [vmem:[%s2346 + $0x68] sm:$0x1]
      %v2582 = vld [vmem:[%s2346 + $0x6c] sm:$0xf]
      %v2583 = vld [vmem:[%s2346 + $0x70] sm:$0xf]
      %v2584 = vld [vmem:[%s2346 + $0x74] sm:$0x1]
      %v2585 = vld [vmem:[%s2346 + $0x78] sm:$0xf]
      %v2586 = vld [vmem:[%s2346 + $0x7c] sm:$0xf]
      %v2587 = vld [vmem:[%s2346 + $0x80] sm:$0x1]
      %v2588 = vld [vmem:[%s2346 + $0x84] sm:$0xf]
      %v2589 = vld [vmem:[%s2346 + $0x88] sm:$0xf]
      %v2590 = vld [vmem:[%s2346 + $0x8c] sm:$0x1]
      %v2591 = vld [vmem:[%s2346 + $0x90] sm:$0xf]
      %v2592 = vld [vmem:[%s2346 + $0x94] sm:$0xf]
      %v2593 = vld [vmem:[%s2346 + $0x98] sm:$0x1]
      %v2594 = vld [vmem:[%s2346 + $0x9c] sm:$0xf]
      %v2595 = vld [vmem:[%s2346 + $0xa0] sm:$0xf]
      %v2596 = vld [vmem:[%s2346 + $0xa4] sm:$0x1]
      %v2597 = vld [vmem:[%s2346 + $0xa8] sm:$0xf]
      %v2598 = vld [vmem:[%s2346 + $0xac] sm:$0xf]
      %v2599 = vld [vmem:[%s2346 + $0xb0] sm:$0x1]
      %v2600 = vld [vmem:[%s2346 + $0xb4] sm:$0xf]
      %v2601 = vld [vmem:[%s2346 + $0xb8] sm:$0xf]
      %v2602 = vld [vmem:[%s2346 + $0xbc] sm:$0x1]
      %v2604 = vshrl.u32 %v2555, 16
      %v2606 = vrot.slane %v2604, 4
      %v2607 = vshll.u32 %v2555, 16
      %v2609 = vrot.slane %v2607, 5
      %v2610 = vor.u32 %v2606, %v2609
      %v2611 = vrot.slane %v2610, 4
      %v2613 = vshll.u32 %v2556, 16
      %v2615 = vrot.slane %v2613, 5
      %v2616 = vsel %vm234, %v2611, %v2615
      %v2617 = vshrl.u32 %v2556, 16
      %v2619 = vrot.slane %v2617, 4
      %v2620 = vor.u32 %v2619, %v2615
      %v2621 = vrot.slane %v2620, 4
      %v2623 = vshll.u32 %v2557, 16
      %v2625 = vrot.slane %v2623, 5
      %v2626 = vsel %vm234, %v2621, %v2625
      %v2628 = vshrl.u32 %v2558, 16
      %v2630 = vrot.slane %v2628, 4
      %v2631 = vshll.u32 %v2558, 16
      %v2633 = vrot.slane %v2631, 5
      %v2634 = vor.u32 %v2630, %v2633
      %v2635 = vrot.slane %v2634, 4
      %v2637 = vshll.u32 %v2559, 16
      %v2639 = vrot.slane %v2637, 5
      %v2640 = vsel %vm234, %v2635, %v2639
      %v2641 = vshrl.u32 %v2559, 16
      %v2643 = vrot.slane %v2641, 4
      %v2644 = vor.u32 %v2643, %v2639
      %v2645 = vrot.slane %v2644, 4
      %v2647 = vshll.u32 %v2560, 16
      %v2649 = vrot.slane %v2647, 5
      %v2650 = vsel %vm234, %v2645, %v2649
      %v2652 = vshrl.u32 %v2561, 16
      %v2654 = vrot.slane %v2652, 4
      %v2655 = vshll.u32 %v2561, 16
      %v2657 = vrot.slane %v2655, 5
      %v2658 = vor.u32 %v2654, %v2657
      %v2659 = vrot.slane %v2658, 4
      %v2661 = vshll.u32 %v2562, 16
      %v2663 = vrot.slane %v2661, 5
      %v2664 = vsel %vm234, %v2659, %v2663
      %v2665 = vshrl.u32 %v2562, 16
      %v2667 = vrot.slane %v2665, 4
      %v2668 = vor.u32 %v2667, %v2663
      %v2669 = vrot.slane %v2668, 4
      %v2671 = vshll.u32 %v2563, 16
      %v2673 = vrot.slane %v2671, 5
      %v2674 = vsel %vm234, %v2669, %v2673
      %v2676 = vshrl.u32 %v2564, 16
      %v2678 = vrot.slane %v2676, 4
      %v2679 = vshll.u32 %v2564, 16
      %v2681 = vrot.slane %v2679, 5
      %v2682 = vor.u32 %v2678, %v2681
      %v2683 = vrot.slane %v2682, 4
      %v2685 = vshll.u32 %v2565, 16
      %v2687 = vrot.slane %v2685, 5
      %v2688 = vsel %vm234, %v2683, %v2687
      %v2689 = vshrl.u32 %v2565, 16
      %v2691 = vrot.slane %v2689, 4
      %v2692 = vor.u32 %v2691, %v2687
      %v2693 = vrot.slane %v2692, 4
      %v2695 = vshll.u32 %v2566, 16
      %v2697 = vrot.slane %v2695, 5
      %v2698 = vsel %vm234, %v2693, %v2697
      %v2700 = vshrl.u32 %v2567, 16
      %v2702 = vrot.slane %v2700, 4
      %v2703 = vshll.u32 %v2567, 16
      %v2705 = vrot.slane %v2703, 5
      %v2706 = vor.u32 %v2702, %v2705
      %v2707 = vrot.slane %v2706, 4
      %v2709 = vshll.u32 %v2568, 16
      %v2711 = vrot.slane %v2709, 5
      %v2712 = vsel %vm234, %v2707, %v2711
      %v2713 = vshrl.u32 %v2568, 16
      %v2715 = vrot.slane %v2713, 4
      %v2716 = vor.u32 %v2715, %v2711
      %v2717 = vrot.slane %v2716, 4
      %v2719 = vshll.u32 %v2569, 16
      %v2721 = vrot.slane %v2719, 5
      %v2722 = vsel %vm234, %v2717, %v2721
      %v2724 = vshrl.u32 %v2570, 16
      %v2726 = vrot.slane %v2724, 4
      %v2727 = vshll.u32 %v2570, 16
      %v2729 = vrot.slane %v2727, 5
      %v2730 = vor.u32 %v2726, %v2729
      %v2731 = vrot.slane %v2730, 4
      %v2733 = vshll.u32 %v2571, 16
      %v2735 = vrot.slane %v2733, 5
      %v2736 = vsel %vm234, %v2731, %v2735
      %v2737 = vshrl.u32 %v2571, 16
      %v2739 = vrot.slane %v2737, 4
      %v2740 = vor.u32 %v2739, %v2735
      %v2741 = vrot.slane %v2740, 4
      %v2743 = vshll.u32 %v2572, 16
      %v2745 = vrot.slane %v2743, 5
      %v2746 = vsel %vm234, %v2741, %v2745
      %v2748 = vshrl.u32 %v2573, 16
      %v2750 = vrot.slane %v2748, 4
      %v2751 = vshll.u32 %v2573, 16
      %v2753 = vrot.slane %v2751, 5
      %v2754 = vor.u32 %v2750, %v2753
      %v2755 = vrot.slane %v2754, 4
      %v2757 = vshll.u32 %v2574, 16
      %v2759 = vrot.slane %v2757, 5
      %v2760 = vsel %vm234, %v2755, %v2759
      %v2761 = vshrl.u32 %v2574, 16
      %v2763 = vrot.slane %v2761, 4
      %v2764 = vor.u32 %v2763, %v2759
      %v2765 = vrot.slane %v2764, 4
      %v2767 = vshll.u32 %v2575, 16
      %v2769 = vrot.slane %v2767, 5
      %v2770 = vsel %vm234, %v2765, %v2769
      %v2772 = vshrl.u32 %v2576, 16
      %v2774 = vrot.slane %v2772, 4
      %v2775 = vshll.u32 %v2576, 16
      %v2777 = vrot.slane %v2775, 5
      %v2778 = vor.u32 %v2774, %v2777
      %v2779 = vrot.slane %v2778, 4
      %v2781 = vshll.u32 %v2577, 16
      %v2783 = vrot.slane %v2781, 5
      %v2784 = vsel %vm234, %v2779, %v2783
      %v2785 = vshrl.u32 %v2577, 16
      %v2787 = vrot.slane %v2785, 4
      %v2788 = vor.u32 %v2787, %v2783
      %v2789 = vrot.slane %v2788, 4
      %v2791 = vshll.u32 %v2578, 16
      %v2793 = vrot.slane %v2791, 5
      %v2794 = vsel %vm234, %v2789, %v2793
      %v2796 = vshrl.u32 %v2579, 16
      %v2798 = vrot.slane %v2796, 4
      %v2799 = vshll.u32 %v2579, 16
      %v2801 = vrot.slane %v2799, 5
      %v2802 = vor.u32 %v2798, %v2801
      %v2803 = vrot.slane %v2802, 4
      %v2805 = vshll.u32 %v2580, 16
      %v2807 = vrot.slane %v2805, 5
      %v2808 = vsel %vm234, %v2803, %v2807
      %v2809 = vshrl.u32 %v2580, 16
      %v2811 = vrot.slane %v2809, 4
      %v2812 = vor.u32 %v2811, %v2807
      %v2813 = vrot.slane %v2812, 4
      %v2815 = vshll.u32 %v2581, 16
      %v2817 = vrot.slane %v2815, 5
      %v2818 = vsel %vm234, %v2813, %v2817
      %v2820 = vshrl.u32 %v2582, 16
      %v2822 = vrot.slane %v2820, 4
      %v2823 = vshll.u32 %v2582, 16
      %v2825 = vrot.slane %v2823, 5
      %v2826 = vor.u32 %v2822, %v2825
      %v2827 = vrot.slane %v2826, 4
      %v2829 = vshll.u32 %v2583, 16
      %v2831 = vrot.slane %v2829, 5
      %v2832 = vsel %vm234, %v2827, %v2831
      %v2833 = vshrl.u32 %v2583, 16
      %v2835 = vrot.slane %v2833, 4
      %v2836 = vor.u32 %v2835, %v2831
      %v2837 = vrot.slane %v2836, 4
      %v2839 = vshll.u32 %v2584, 16
      %v2841 = vrot.slane %v2839, 5
      %v2842 = vsel %vm234, %v2837, %v2841
      %v2844 = vshrl.u32 %v2585, 16
      %v2846 = vrot.slane %v2844, 4
      %v2847 = vshll.u32 %v2585, 16
      %v2849 = vrot.slane %v2847, 5
      %v2850 = vor.u32 %v2846, %v2849
      %v2851 = vrot.slane %v2850, 4
      %v2853 = vshll.u32 %v2586, 16
      %v2855 = vrot.slane %v2853, 5
      %v2856 = vsel %vm234, %v2851, %v2855
      %v2857 = vshrl.u32 %v2586, 16
      %v2859 = vrot.slane %v2857, 4
      %v2860 = vor.u32 %v2859, %v2855
      %v2861 = vrot.slane %v2860, 4
      %v2863 = vshll.u32 %v2587, 16
      %v2865 = vrot.slane %v2863, 5
      %v2866 = vsel %vm234, %v2861, %v2865
      %v2868 = vshrl.u32 %v2588, 16
      %v2870 = vrot.slane %v2868, 4
      %v2871 = vshll.u32 %v2588, 16
      %v2873 = vrot.slane %v2871, 5
      %v2874 = vor.u32 %v2870, %v2873
      %v2875 = vrot.slane %v2874, 4
      %v2877 = vshll.u32 %v2589, 16
      %v2879 = vrot.slane %v2877, 5
      %v2880 = vsel %vm234, %v2875, %v2879
      %v2881 = vshrl.u32 %v2589, 16
      %v2883 = vrot.slane %v2881, 4
      %v2884 = vor.u32 %v2883, %v2879
      %v2885 = vrot.slane %v2884, 4
      %v2887 = vshll.u32 %v2590, 16
      %v2889 = vrot.slane %v2887, 5
      %v2890 = vsel %vm234, %v2885, %v2889
      %v2892 = vshrl.u32 %v2591, 16
      %v2894 = vrot.slane %v2892, 4
      %v2895 = vshll.u32 %v2591, 16
      %v2897 = vrot.slane %v2895, 5
      %v2898 = vor.u32 %v2894, %v2897
      %v2899 = vrot.slane %v2898, 4
      %v2901 = vshll.u32 %v2592, 16
      %v2903 = vrot.slane %v2901, 5
      %v2904 = vsel %vm234, %v2899, %v2903
      %v2905 = vshrl.u32 %v2592, 16
      %v2907 = vrot.slane %v2905, 4
      %v2908 = vor.u32 %v2907, %v2903
      %v2909 = vrot.slane %v2908, 4
      %v2911 = vshll.u32 %v2593, 16
      %v2913 = vrot.slane %v2911, 5
      %v2914 = vsel %vm234, %v2909, %v2913
      %v2916 = vshrl.u32 %v2594, 16
      %v2918 = vrot.slane %v2916, 4
      %v2919 = vshll.u32 %v2594, 16
      %v2921 = vrot.slane %v2919, 5
      %v2922 = vor.u32 %v2918, %v2921
      %v2923 = vrot.slane %v2922, 4
      %v2925 = vshll.u32 %v2595, 16
      %v2927 = vrot.slane %v2925, 5
      %v2928 = vsel %vm234, %v2923, %v2927
      %v2929 = vshrl.u32 %v2595, 16
      %v2931 = vrot.slane %v2929, 4
      %v2932 = vor.u32 %v2931, %v2927
      %v2933 = vrot.slane %v2932, 4
      %v2935 = vshll.u32 %v2596, 16
      %v2937 = vrot.slane %v2935, 5
      %v2938 = vsel %vm234, %v2933, %v2937
      %v2940 = vshrl.u32 %v2597, 16
      %v2942 = vrot.slane %v2940, 4
      %v2943 = vshll.u32 %v2597, 16
      %v2945 = vrot.slane %v2943, 5
      %v2946 = vor.u32 %v2942, %v2945
      %v2947 = vrot.slane %v2946, 4
      %v2949 = vshll.u32 %v2598, 16
      %v2951 = vrot.slane %v2949, 5
      %v2952 = vsel %vm234, %v2947, %v2951
      %v2953 = vshrl.u32 %v2598, 16
      %v2955 = vrot.slane %v2953, 4
      %v2956 = vor.u32 %v2955, %v2951
      %v2957 = vrot.slane %v2956, 4
      %v2959 = vshll.u32 %v2599, 16
      %v2961 = vrot.slane %v2959, 5
      %v2962 = vsel %vm234, %v2957, %v2961
      %v2964 = vshrl.u32 %v2600, 16
      %v2966 = vrot.slane %v2964, 4
      %v2967 = vshll.u32 %v2600, 16
      %v2969 = vrot.slane %v2967, 5
      %v2970 = vor.u32 %v2966, %v2969
      %v2971 = vrot.slane %v2970, 4
      %v2973 = vshll.u32 %v2601, 16
      %v2975 = vrot.slane %v2973, 5
      %v2976 = vsel %vm234, %v2971, %v2975
      %v2977 = vshrl.u32 %v2601, 16
      %v2979 = vrot.slane %v2977, 4
      %v2980 = vor.u32 %v2979, %v2975
      %v2981 = vrot.slane %v2980, 4
      %v2983 = vshll.u32 %v2602, 16
      %v2985 = vrot.slane %v2983, 5
      %v2986 = vsel %vm234, %v2981, %v2985
      %s2987 = scalar_lea.vmem %s1, 28
      %v2988 = vld [vmem:[%s2987] sm:$0xf]
      %v2989 = vunpack.c.l.b16 %v2616
      %v2990 = vunpack.c.l.b16 %v2626
      %v2991 = vunpack.c.l.b16 %v2640
      %v2992 = vunpack.c.l.b16 %v2650
      %v2993 = vunpack.c.l.b16 %v2664
      %v2994 = vunpack.c.l.b16 %v2674
      %v2995 = vunpack.c.l.b16 %v2688
      %v2996 = vunpack.c.l.b16 %v2698
      %v2997 = vunpack.c.l.b16 %v2712
      %v2998 = vunpack.c.l.b16 %v2722
      %v2999 = vunpack.c.l.b16 %v2736
      %v3000 = vunpack.c.l.b16 %v2746
      %v3001 = vunpack.c.l.b16 %v2760
      %v3002 = vunpack.c.l.b16 %v2770
      %v3003 = vunpack.c.l.b16 %v2784
      %v3004 = vunpack.c.l.b16 %v2794
      %v3005 = vunpack.c.l.b16 %v2808
      %v3006 = vunpack.c.l.b16 %v2818
      %v3007 = vunpack.c.l.b16 %v2832
      %v3008 = vunpack.c.l.b16 %v2842
      %v3009 = vunpack.c.l.b16 %v2856
      %v3010 = vunpack.c.l.b16 %v2866
      %v3011 = vunpack.c.l.b16 %v2880
      %v3012 = vunpack.c.l.b16 %v2890
      %v3013 = vunpack.c.l.b16 %v2904
      %v3014 = vunpack.c.l.b16 %v2914
      %v3015 = vunpack.c.l.b16 %v2928
      %v3016 = vunpack.c.l.b16 %v2938
      %v3017 = vunpack.c.l.b16 %v2952
      %v3018 = vunpack.c.l.b16 %v2962
      %v3019 = vunpack.c.l.b16 %v2976
      %v3020 = vunpack.c.l.b16 %v2986
      %v3021 = vpack.c.b16 %v2990, %v2989
      %v3022 = vpack.c.b16 %v2992, %v2991
      %v3023 = vpack.c.b16 %v2994, %v2993
      %v3024 = vpack.c.b16 %v2996, %v2995
      %v3025 = vpack.c.b16 %v2998, %v2997
      %v3026 = vpack.c.b16 %v3000, %v2999
      %v3027 = vpack.c.b16 %v3002, %v3001
      %v3028 = vpack.c.b16 %v3004, %v3003
      %v3029 = vpack.c.b16 %v3006, %v3005
      %v3030 = vpack.c.b16 %v3008, %v3007
      %v3031 = vpack.c.b16 %v3010, %v3009
      %v3032 = vpack.c.b16 %v3012, %v3011
      %v3033 = vpack.c.b16 %v3014, %v3013
      %v3034 = vpack.c.b16 %v3016, %v3015
      %v3035 = vpack.c.b16 %v3018, %v3017
      %v3036 = vpack.c.b16 %v3020, %v3019
      %v3038 = vsel %vm669, %v2988, 0
      %v3041 = vsel %vm669, %v3021, 0
      %v3044 = vsel %vm669, %v3022, 0
      %v3047 = vsel %vm669, %v3023, 0
      %v3050 = vsel %vm669, %v3024, 0
      %v3053 = vsel %vm669, %v3025, 0
      %v3056 = vsel %vm669, %v3026, 0
      %v3059 = vsel %vm669, %v3027, 0
      %v3062 = vsel %vm669, %v3028, 0
      %v3065 = vsel %vm669, %v3029, 0
      %v3068 = vsel %vm669, %v3030, 0
      %v3071 = vsel %vm669, %v3031, 0
      %v3074 = vsel %vm669, %v3032, 0
      %v3077 = vsel %vm669, %v3033, 0
      %v3080 = vsel %vm669, %v3034, 0
      %v3083 = vsel %vm669, %v3035, 0
      %v3086 = vsel %vm669, %v3036, 0
      %3088 = vmatprep.subr.bf16.mxu0 0
      %3089 = vmatpush1.bf16.xpose.msra.mxu0 %v3041
      %3090 = vmatprep.subr.bf16.mxu0 0
      %3091 = vmatpush1.bf16.xpose.msra.mxu0 %v3044
      %3092 = vmatprep.subr.bf16.mxu0 0
      %3093 = vmatpush1.bf16.xpose.msra.mxu0 %v3047
      %3094 = vmatprep.subr.bf16.mxu0 0
      %3095 = vmatpush1.bf16.xpose.msra.mxu0 %v3050
      %3096 = vmatprep.subr.bf16.mxu0 0
      %3097 = vmatpush1.bf16.xpose.msra.mxu0 %v3053
      %3098 = vmatprep.subr.bf16.mxu0 0
      %3099 = vmatpush1.bf16.xpose.msra.mxu0 %v3056
      %3100 = vmatprep.subr.bf16.mxu0 0
      %3101 = vmatpush1.bf16.xpose.msra.mxu0 %v3059
      %3102 = vmatprep.subr.bf16.mxu0 0
      %3103 = vmatpush1.bf16.xpose.msra.mxu0 %v3062
      %3104 = vmatprep.subr.bf16.mxu0 0
      %3105 = vmatpush1.bf16.xpose.msra.mxu0 %v3065
      %3106 = vmatprep.subr.bf16.mxu0 0
      %3107 = vmatpush1.bf16.xpose.msra.mxu0 %v3068
      %3108 = vmatprep.subr.bf16.mxu0 0
      %3109 = vmatpush1.bf16.xpose.msra.mxu0 %v3071
      %3110 = vmatprep.subr.bf16.mxu0 0
      %3111 = vmatpush1.bf16.xpose.msra.mxu0 %v3074
      %3112 = vmatprep.subr.bf16.mxu0 0
      %3113 = vmatpush1.bf16.xpose.msra.mxu0 %v3077
      %3114 = vmatprep.subr.bf16.mxu0 0
      %3115 = vmatpush1.bf16.xpose.msra.mxu0 %v3080
      %3116 = vmatprep.subr.bf16.mxu0 0
      %3117 = vmatpush1.bf16.xpose.msra.mxu0 %v3083
      %3118 = vmatprep.subr.bf16.mxu0 0
      %3119 = vmatpush1.bf16.xpose.msra.mxu0 %v3086
      %3120 = vmatprep.mubr.bf16.mxu0 0
      %3121 = vmatmul.mubr.bf16.gmra.mrb[0].mxu0 %v3038
      %v3122 = vpop.f32.mrb[0].mxu0
      %v3123 = vadd.f32 0.0, %v3122
      %v3124 = vpop.f32.mrb[0].mxu0
      %v3125 = vadd.f32 0.0, %v3124
      %v3126 = vpop.f32.mrb[0].mxu0
      %v3127 = vpop.f32.mrb[0].mxu0
      %3128 = vdwg.mxu0
      %v3129 = vadd.f32 %v2553, %v3123
      %v3130 = vadd.f32 %v2554, %v3125
      %v3131 = vld [vmem:[%s2346] sm:$0xe]
      %v3132 = vld [vmem:[%s2346 + $0xc] sm:$0xe]
      %v3133 = vld [vmem:[%s2346 + $0x18] sm:$0xe]
      %v3134 = vld [vmem:[%s2346 + $0x24] sm:$0xe]
      %v3135 = vld [vmem:[%s2346 + $0x30] sm:$0xe]
      %v3136 = vld [vmem:[%s2346 + $0x3c] sm:$0xe]
      %v3137 = vld [vmem:[%s2346 + $0x48] sm:$0xe]
      %v3138 = vld [vmem:[%s2346 + $0x54] sm:$0xe]
      %v3139 = vld [vmem:[%s2346 + $0x60] sm:$0xe]
      %v3140 = vld [vmem:[%s2346 + $0x6c] sm:$0xe]
      %v3141 = vld [vmem:[%s2346 + $0x78] sm:$0xe]
      %v3142 = vld [vmem:[%s2346 + $0x84] sm:$0xe]
      %v3143 = vld [vmem:[%s2346 + $0x90] sm:$0xe]
      %v3144 = vld [vmem:[%s2346 + $0x9c] sm:$0xe]
      %v3145 = vld [vmem:[%s2346 + $0xa8] sm:$0xe]
      %v3146 = vld [vmem:[%s2346 + $0xb4] sm:$0xe]
      %v3195 = vrot.slane %v3131, 5
      %v3196 = vrot.slane %v3195, 4
      %v3197 = vrot.slane %v2556, 5
      %v3198 = vsel %vm984, %v3196, %v3197
      %v3199 = vrot.slane %v3197, 4
      %v3200 = vrot.slane %v2557, 5
      %v3201 = vsel %vm984, %v3199, %v3200
      %v3202 = vrot.slane %v3132, 5
      %v3203 = vrot.slane %v3202, 4
      %v3204 = vrot.slane %v2559, 5
      %v3205 = vsel %vm984, %v3203, %v3204
      %v3206 = vrot.slane %v3204, 4
      %v3207 = vrot.slane %v2560, 5
      %v3208 = vsel %vm984, %v3206, %v3207
      %v3209 = vrot.slane %v3133, 5
      %v3210 = vrot.slane %v3209, 4
      %v3211 = vrot.slane %v2562, 5
      %v3212 = vsel %vm984, %v3210, %v3211
      %v3213 = vrot.slane %v3211, 4
      %v3214 = vrot.slane %v2563, 5
      %v3215 = vsel %vm984, %v3213, %v3214
      %v3216 = vrot.slane %v3134, 5
      %v3217 = vrot.slane %v3216, 4
      %v3218 = vrot.slane %v2565, 5
      %v3219 = vsel %vm984, %v3217, %v3218
      %v3220 = vrot.slane %v3218, 4
      %v3221 = vrot.slane %v2566, 5
      %v3222 = vsel %vm984, %v3220, %v3221
      %v3223 = vrot.slane %v3135, 5
      %v3224 = vrot.slane %v3223, 4
      %v3225 = vrot.slane %v2568, 5
      %v3226 = vsel %vm984, %v3224, %v3225
      %v3227 = vrot.slane %v3225, 4
      %v3228 = vrot.slane %v2569, 5
      %v3229 = vsel %vm984, %v3227, %v3228
      %v3230 = vrot.slane %v3136, 5
      %v3231 = vrot.slane %v3230, 4
      %v3232 = vrot.slane %v2571, 5
      %v3233 = vsel %vm984, %v3231, %v3232
      %v3234 = vrot.slane %v3232, 4
      %v3235 = vrot.slane %v2572, 5
      %v3236 = vsel %vm984, %v3234, %v3235
      %v3237 = vrot.slane %v3137, 5
      %v3238 = vrot.slane %v3237, 4
      %v3239 = vrot.slane %v2574, 5
      %v3240 = vsel %vm984, %v3238, %v3239
      %v3241 = vrot.slane %v3239, 4
      %v3242 = vrot.slane %v2575, 5
      %v3243 = vsel %vm984, %v3241, %v3242
      %v3244 = vrot.slane %v3138, 5
      %v3245 = vrot.slane %v3244, 4
      %v3246 = vrot.slane %v2577, 5
      %v3247 = vsel %vm984, %v3245, %v3246
      %v3248 = vrot.slane %v3246, 4
      %v3249 = vrot.slane %v2578, 5
      %v3250 = vsel %vm984, %v3248, %v3249
      %v3251 = vrot.slane %v3139, 5
      %v3252 = vrot.slane %v3251, 4
      %v3253 = vrot.slane %v2580, 5
      %v3254 = vsel %vm984, %v3252, %v3253
      %v3255 = vrot.slane %v3253, 4
      %v3256 = vrot.slane %v2581, 5
      %v3257 = vsel %vm984, %v3255, %v3256
      %v3258 = vrot.slane %v3140, 5
      %v3259 = vrot.slane %v3258, 4
      %v3260 = vrot.slane %v2583, 5
      %v3261 = vsel %vm984, %v3259, %v3260
      %v3262 = vrot.slane %v3260, 4
      %v3263 = vrot.slane %v2584, 5
      %v3264 = vsel %vm984, %v3262, %v3263
      %v3265 = vrot.slane %v3141, 5
      %v3266 = vrot.slane %v3265, 4
      %v3267 = vrot.slane %v2586, 5
      %v3268 = vsel %vm984, %v3266, %v3267
      %v3269 = vrot.slane %v3267, 4
      %v3270 = vrot.slane %v2587, 5
      %v3271 = vsel %vm984, %v3269, %v3270
      %v3272 = vrot.slane %v3142, 5
      %v3273 = vrot.slane %v3272, 4
      %v3274 = vrot.slane %v2589, 5
      %v3275 = vsel %vm984, %v3273, %v3274
      %v3276 = vrot.slane %v3274, 4
      %v3277 = vrot.slane %v2590, 5
      %v3278 = vsel %vm984, %v3276, %v3277
      %v3279 = vrot.slane %v3143, 5
      %v3280 = vrot.slane %v3279, 4
      %v3281 = vrot.slane %v2592, 5
      %v3282 = vsel %vm984, %v3280, %v3281
      %v3283 = vrot.slane %v3281, 4
      %v3284 = vrot.slane %v2593, 5
      %v3285 = vsel %vm984, %v3283, %v3284
      %v3286 = vrot.slane %v3144, 5
      %v3287 = vrot.slane %v3286, 4
      %v3288 = vrot.slane %v2595, 5
      %v3289 = vsel %vm984, %v3287, %v3288
      %v3290 = vrot.slane %v3288, 4
      %v3291 = vrot.slane %v2596, 5
      %v3292 = vsel %vm984, %v3290, %v3291
      %v3293 = vrot.slane %v3145, 5
      %v3294 = vrot.slane %v3293, 4
      %v3295 = vrot.slane %v2598, 5
      %v3296 = vsel %vm984, %v3294, %v3295
      %v3297 = vrot.slane %v3295, 4
      %v3298 = vrot.slane %v2599, 5
      %v3299 = vsel %vm984, %v3297, %v3298
      %v3300 = vrot.slane %v3146, 5
      %v3301 = vrot.slane %v3300, 4
      %v3302 = vrot.slane %v2601, 5
      %v3303 = vsel %vm984, %v3301, %v3302
      %v3304 = vrot.slane %v3302, 4
      %v3305 = vrot.slane %v2602, 5
      %v3306 = vsel %vm984, %v3304, %v3305
      %s3307 = scalar_lea.vmem %s1, 32
      %v3308 = vld [vmem:[%s3307] sm:$0xf]
      %v3309 = vunpack.c.l.b16 %v3198
      %v3310 = vunpack.c.l.b16 %v3201
      %v3311 = vunpack.c.l.b16 %v3205
      %v3312 = vunpack.c.l.b16 %v3208
      %v3313 = vunpack.c.l.b16 %v3212
      %v3314 = vunpack.c.l.b16 %v3215
      %v3315 = vunpack.c.l.b16 %v3219
      %v3316 = vunpack.c.l.b16 %v3222
      %v3317 = vunpack.c.l.b16 %v3226
      %v3318 = vunpack.c.l.b16 %v3229
      %v3319 = vunpack.c.l.b16 %v3233
      %v3320 = vunpack.c.l.b16 %v3236
      %v3321 = vunpack.c.l.b16 %v3240
      %v3322 = vunpack.c.l.b16 %v3243
      %v3323 = vunpack.c.l.b16 %v3247
      %v3324 = vunpack.c.l.b16 %v3250
      %v3325 = vunpack.c.l.b16 %v3254
      %v3326 = vunpack.c.l.b16 %v3257
      %v3327 = vunpack.c.l.b16 %v3261
      %v3328 = vunpack.c.l.b16 %v3264
      %v3329 = vunpack.c.l.b16 %v3268
      %v3330 = vunpack.c.l.b16 %v3271
      %v3331 = vunpack.c.l.b16 %v3275
      %v3332 = vunpack.c.l.b16 %v3278
      %v3333 = vunpack.c.l.b16 %v3282
      %v3334 = vunpack.c.l.b16 %v3285
      %v3335 = vunpack.c.l.b16 %v3289
      %v3336 = vunpack.c.l.b16 %v3292
      %v3337 = vunpack.c.l.b16 %v3296
      %v3338 = vunpack.c.l.b16 %v3299
      %v3339 = vunpack.c.l.b16 %v3303
      %v3340 = vunpack.c.l.b16 %v3306
      %v3341 = vpack.c.b16 %v3310, %v3309
      %v3342 = vpack.c.b16 %v3312, %v3311
      %v3343 = vpack.c.b16 %v3314, %v3313
      %v3344 = vpack.c.b16 %v3316, %v3315
      %v3345 = vpack.c.b16 %v3318, %v3317
      %v3346 = vpack.c.b16 %v3320, %v3319
      %v3347 = vpack.c.b16 %v3322, %v3321
      %v3348 = vpack.c.b16 %v3324, %v3323
      %v3349 = vpack.c.b16 %v3326, %v3325
      %v3350 = vpack.c.b16 %v3328, %v3327
      %v3351 = vpack.c.b16 %v3330, %v3329
      %v3352 = vpack.c.b16 %v3332, %v3331
      %v3353 = vpack.c.b16 %v3334, %v3333
      %v3354 = vpack.c.b16 %v3336, %v3335
      %v3355 = vpack.c.b16 %v3338, %v3337
      %v3356 = vpack.c.b16 %v3340, %v3339
      %v3358 = vsel %vm669, %v3308, 0
      %v3361 = vsel %vm669, %v3341, 0
      %v3364 = vsel %vm669, %v3342, 0
      %v3367 = vsel %vm669, %v3343, 0
      %v3370 = vsel %vm669, %v3344, 0
      %v3373 = vsel %vm669, %v3345, 0
      %v3376 = vsel %vm669, %v3346, 0
      %v3379 = vsel %vm669, %v3347, 0
      %v3382 = vsel %vm669, %v3348, 0
      %v3385 = vsel %vm669, %v3349, 0
      %v3388 = vsel %vm669, %v3350, 0
      %v3391 = vsel %vm669, %v3351, 0
      %v3394 = vsel %vm669, %v3352, 0
      %v3397 = vsel %vm669, %v3353, 0
      %v3400 = vsel %vm669, %v3354, 0
      %v3403 = vsel %vm669, %v3355, 0
      %v3406 = vsel %vm669, %v3356, 0
      %3408 = vmatprep.subr.bf16.mxu0 0
      %3409 = vmatpush1.bf16.xpose.msra.mxu0 %v3361
      %3410 = vmatprep.subr.bf16.mxu0 0
      %3411 = vmatpush1.bf16.xpose.msra.mxu0 %v3364
      %3412 = vmatprep.subr.bf16.mxu0 0
      %3413 = vmatpush1.bf16.xpose.msra.mxu0 %v3367
      %3414 = vmatprep.subr.bf16.mxu0 0
      %3415 = vmatpush1.bf16.xpose.msra.mxu0 %v3370
      %3416 = vmatprep.subr.bf16.mxu0 0
      %3417 = vmatpush1.bf16.xpose.msra.mxu0 %v3373
      %3418 = vmatprep.subr.bf16.mxu0 0
      %3419 = vmatpush1.bf16.xpose.msra.mxu0 %v3376
      %3420 = vmatprep.subr.bf16.mxu0 0
      %3421 = vmatpush1.bf16.xpose.msra.mxu0 %v3379
      %3422 = vmatprep.subr.bf16.mxu0 0
      %3423 = vmatpush1.bf16.xpose.msra.mxu0 %v3382
      %3424 = vmatprep.subr.bf16.mxu0 0
      %3425 = vmatpush1.bf16.xpose.msra.mxu0 %v3385
      %3426 = vmatprep.subr.bf16.mxu0 0
      %3427 = vmatpush1.bf16.xpose.msra.mxu0 %v3388
      %3428 = vmatprep.subr.bf16.mxu0 0
      %3429 = vmatpush1.bf16.xpose.msra.mxu0 %v3391
      %3430 = vmatprep.subr.bf16.mxu0 0
      %3431 = vmatpush1.bf16.xpose.msra.mxu0 %v3394
      %3432 = vmatprep.subr.bf16.mxu0 0
      %3433 = vmatpush1.bf16.xpose.msra.mxu0 %v3397
      %3434 = vmatprep.subr.bf16.mxu0 0
      %3435 = vmatpush1.bf16.xpose.msra.mxu0 %v3400
      %3436 = vmatprep.subr.bf16.mxu0 0
      %3437 = vmatpush1.bf16.xpose.msra.mxu0 %v3403
      %3438 = vmatprep.subr.bf16.mxu0 0
      %3439 = vmatpush1.bf16.xpose.msra.mxu0 %v3406
      %3440 = vmatprep.mubr.bf16.mxu0 0
      %3441 = vmatmul.mubr.bf16.gmra.mrb[0].mxu0 %v3358
      %v3442 = vpop.f32.mrb[0].mxu0
      %v3443 = vadd.f32 0.0, %v3442
      %v3444 = vpop.f32.mrb[0].mxu0
      %v3445 = vadd.f32 0.0, %v3444
      %v3446 = vpop.f32.mrb[0].mxu0
      %v3447 = vpop.f32.mrb[0].mxu0
      %3448 = vdwg.mxu0
      %v3449 = vadd.f32 %v3129, %v3443
      %v3450 = vadd.f32 %v3130, %v3445
      %v3451 = vpack.c.bf16 %v3449, %v3449
      %v3452 = vpack.c.bf16 %v3450, %v3450
      %v3455 = vunpack.c.l.b16 %v3451
      %v3456 = vunpack.c.l.b16 %v3452
      %v3457 = vpack.c.b16 %v3456, %v3455
      %3459 = vst [vmem:[%s177] sm:$0xff] %v3457
      %v3460 = vadd.f32 %v3449, %v3450
      %3461 = vadd.xlane.f32.xlu0 %v3460
      %v3462 = vpop.xlane.xlu0 %3461
      %vm3463 = vcmask 7168
      %3464 = vst.msk [vmem:[%s181] sm:$0xff] %vm3463, %v3462
      %v3465 = vmul.f32 %v3449, %v3449
      %v3466 = vmul.f32 %v3450, %v3450
      %v3467 = vadd.f32 %v3465, %v3466
      %3468 = vadd.xlane.f32.xlu0 %v3467
      %v3469 = vpop.xlane.xlu0 %3468
      %vm3470 = vcmask 15368
      %3471 = vst.msk [vmem:[%s181] sm:$0xff] %vm3470, %v3469
      %p3472 = scmp.lt.s32.totalorder %s15, 1
      %s3473 = scalar_select %p3472, %s15, 1
      %s3474 = smul.addr %s3473, 2
      %s3475 = smul.addr %s3474, 4
      %s3476 = scalar_lea.vmem %s2, %s3475
      %p3477 = scmp.lt.s32.totalorder %s15, 1
      %s3478 = scalar_select %p3477, %s15, 1
      %s3479 = smul.addr %s3478, 8
      %s3480 = scalar_lea.vmem %s3, %s3479
      // Predicated region
      $region29: #{conv_block_forward.2} parent=27 // pred_check
        %p3481 = pneg %p80
      $region30: #{conv_block_forward.2} parent=27 // pred_check_branch
        %3483 = sbr.rel (%p3481) target = $region32
      $region31: #{conv_block_forward.2} parent=27 // pred_region
        _
      $region32: #{conv_block_forward.2} parent=27 // pred_fallthru
        _
      // Predicated region
      $region33: #{conv_block_forward.2} parent=27 // pred_check
        %p3484 = pneg %p106
      $region34: #{conv_block_forward.2} parent=27 // pred_check_branch
        %3486 = sbr.rel (%p3484) target = $region36
      $region35: #{conv_block_forward.2} parent=27 // pred_region
        _
      $region36: #{conv_block_forward.2} parent=27 // pred_fallthru
        _
    $region28: #{conv_block_forward.2} parent=5 // pred_fallthru
      _
    %p3487 = scmp.le.s32.totalorder 2, %s10
    // Predicated region
    $region37: #{conv_block_forward.2} parent=5 // pred_check
      %p3488 = pneg %p3487
    $region38: #{conv_block_forward.2} parent=5 // pred_check_branch
      %3490 = sbr.rel (%p3488) target = $region40
    $region39: #{conv_block_forward.2} parent=5 // pred_region
      %s3491 = ssub.s32 %s10, 2
      // Predicated region
      $region41: #{conv_block_forward.2} parent=39 // pred_check
        %p3492 = pneg %p86
      $region42: #{conv_block_forward.2} parent=39 // pred_check_branch
        %3494 = sbr.rel (%p3492) target = $region44
      $region43: #{conv_block_forward.2} parent=39 // pred_region
        %p3495 = scmp.lt.s32.totalorder %s16, 1
        %s3496 = scalar_select %p3495, %s16, 1
        %s3497 = smul.addr %s3496, 2
        %s3498 = smul.addr %s3497, 4
        %s3499 = scalar_lea.vmem %s2, %s3498
      $region44: #{conv_block_forward.2} parent=39 // pred_fallthru
        _
      // Predicated region
      $region45: #{conv_block_forward.2} parent=39 // pred_check
        %p3500 = pneg %p112
      $region46: #{conv_block_forward.2} parent=39 // pred_check_branch
        %3502 = sbr.rel (%p3500) target = $region48
      $region47: #{conv_block_forward.2} parent=39 // pred_region
        %p3503 = scmp.lt.s32.totalorder %s16, 1
        %s3504 = scalar_select %p3503, %s16, 1
        %s3505 = smul.addr %s3504, 8
        %s3506 = scalar_lea.vmem %s3, %s3505
      $region48: #{conv_block_forward.2} parent=39 // pred_fallthru
        _
    $region40: #{conv_block_forward.2} parent=5 // pred_fallthru
      _
  $region6: #{conv_block_forward.2} parent=0 // loop_footer
    %s14 = sadd.s32 1, %s10
  $region7: #{conv_block_forward.2} parent=0 // loop_footer_branch
    %9 = sbr.rel target = $region3
  $region8: #{conv_block_forward.2} parent=0 // loop_exit
    _

</llo_original>
